<compile_context>
chip_gen: v6e
topology: v6e:2x2x1
jax: 0.10.0
libtpu: 0.0.40
codegen_flags: <defaults>
</compile_context>

<pallas_src>
import jax
import jax.numpy as jnp
import numpy as np
from jax.experimental import pallas as pl
from jax.experimental.pallas import tpu as pltpu


# ------------------- Pallas kernel 1: the sequential (recurrent) hot path -------------------
def decoder_recurrent_kernel(feat_ref, efeat_ref, w_h5_ref, v_row_ref,
                             embgate_ref, w_ic_ref,
                             h_all_ref,
                             h_sc, c_sc, hbuf):
    Tt, B, G4 = embgate_ref.shape
    H = G4 // 4
    L = feat_ref.shape[1]
    bf16 = jnp.bfloat16

    # (h, c) persist across time-chunks in VMEM scratch; zero-init on the first chunk
    # (init_hidden() == zeros).
    @pl.when(pl.program_id(0) == 0)
    def _():
        h_sc[...] = jnp.zeros_like(h_sc)
        c_sc[...] = jnp.zeros_like(c_sc)

    # Loop-invariant loads / broadcasts hoisted out of the time loop.
    feats = feat_ref[...]                       # (B, L, F) f32, feeds the weighted sum
    e_feat = efeat_ref[...]                     # (B, L, H) f32, = features @ W_f + b_att
    w_h5 = w_h5_ref[...]                        # (H, 5H)  bf16, fused [W_h | W_hh(perm)]
    w_ic = w_ic_ref[...]                        # (F, 4H)  bf16, context part of LSTM W_ih
    v_bl = jnp.broadcast_to(v_row_ref[...].reshape(1, 1, H), (B, L, H))   # hoisted broadcast

    h = h_sc[...]                               # (B, H) f32
    c = c_sc[...]                               # (B, H) f32

    # Static (fully unrolled) time loop within the chunk — Tt is small by construction.
    for t in range(Tt):
        # --- single fused h-dependent matmul: attention hidden-term + LSTM hidden gates ---
        hw = jnp.dot(h.astype(bf16), w_h5, preferred_element_type=jnp.float32)   # (B, 5H)
        e_hid = hw[:, :H]                        # attention hidden projection
        h_gates = hw[:, H:]                      # h @ W_hh (gate-permuted)

        # --- additive attention (v.bias is a uniform shift before softmax -> dropped) ---
        energy = jnp.tanh(e_feat + e_hid[:, None, :])          # (B, L, H) f32
        scores = jnp.sum(energy * v_bl, axis=-1)               # (B, L)  VPU mul + lane reduce
        scores = scores - jnp.max(scores, axis=1, keepdims=True)
        e = jnp.exp(scores)
        alpha = e / jnp.sum(e, axis=1, keepdims=True)           # (B, L)
        context = jnp.sum(feats * alpha[:, :, None], axis=1)    # (B, F) f32

        # --- LSTM cell (embedding @ W_ie + biases precomputed outside; gates = [i,f,o,g]) ---
        gates = (embgate_ref[t] + h_gates
                 + jnp.dot(context.astype(bf16), w_ic,
                           preferred_element_type=jnp.float32))  # (B, 4H) f32

        sig = jax.nn.sigmoid(gates[:, :3 * H])   # one contiguous sigmoid slab: i | f | o
        i_g = sig[:, 0 * H:1 * H]
        f_g = sig[:, 1 * H:2 * H]
        o_g = sig[:, 2 * H:3 * H]
        g_g = jnp.tanh(gates[:, 3 * H:])

        c = f_g * c + i_g * g_g
        h = o_g * jnp.tanh(c)

        hbuf[pl.ds(t * B, B), :] = h             # static-offset row store into f32 chunk buf

    h_sc[...] = h
    c_sc[...] = c
    # Single dense, lane-aligned bf16 store of the whole chunk's hidden states.
    h_all_ref[...] = hbuf[...].astype(h_all_ref.dtype)


# ------------------- Pallas kernel 2: batched vocab projection (off the serial path) --------
def output_proj_kernel(h_ref, w_ref, b_ref, o_ref):
    o_ref[...] = (jnp.dot(h_ref[...], w_ref[...],
                          preferred_element_type=jnp.float32)
                  + b_ref[...])


# ------------------------------------- wrapper ----------------------------------------------
def _permute_gates(w, H):
    """Reorder the 4H gate axis from PyTorch [i, f, g, o] to [i, f, o, g]."""
    return jnp.concatenate([w[..., 0 * H:2 * H],      # i, f
                            w[..., 3 * H:4 * H],      # o
                            w[..., 2 * H:3 * H]],     # g
                           axis=-1)


def decoder_forward(features, captions, params):
    """features: (B, L, F) f32, captions: (T, B) i32 -> (T, B, V) f32 logits."""
    T, B = captions.shape
    _, L, F = features.shape
    E = params["embed"].shape[1]
    H = params["w_hh"].shape[0]
    V = params["w_out"].shape[1]
    bf16 = jnp.bfloat16

    # ---- weight prep: split attention Linear, permute gates, fuse h-dependent weights ----
    w_f = params["w_att"][:F, :].astype(bf16)                    # (F, H) feature half
    w_h = params["w_att"][F:, :].astype(bf16)                    # (H, H) hidden half
    w_hh_p = _permute_gates(params["w_hh"], H).astype(bf16)      # (H, 4H) [i,f,o,g]
    w_h5 = jnp.concatenate([w_h, w_hh_p], axis=1)                # (H, 5H) fused h-weights
    w_ic_p = _permute_gates(params["w_ic"], H).astype(bf16)      # (F, 4H)
    w_ie_p = _permute_gates(params["w_ie"], H).astype(bf16)      # (E, 4H)
    b_lstm_p = _permute_gates(params["b_lstm"], H)               # (1, 4H) f32

    # ---- (1) time-invariant feature projection, hoisted out of the time loop ----
    e_feat = (jnp.dot(features.reshape(B * L, F).astype(bf16), w_f,
                      preferred_element_type=jnp.float32).reshape(B, L, H)
              + params["b_att"])                                 # (B, L, H) f32, bias folded

    # ---- (2) embedding lookup + embedding contribution to the gates for ALL timesteps ----
    embeddings = params["embed"][captions]                       # (T, B, E) f32
    emb_gates = (jnp.dot(embeddings.reshape(T * B, E).astype(bf16), w_ie_p,
                         preferred_element_type=jnp.float32).reshape(T, B, 4 * H)
                 + b_lstm_p)                                     # (T, B, 4H) f32

    v_row = params["v_w"].reshape(1, H).astype(jnp.float32)      # (1, H)

    # ---- (3) sequential recurrent kernel: time axis blocked into chunks of Tt steps ----
    if T % 8 == 0:
        Tt = 8
    elif T % 4 == 0:
        Tt = 4
    else:
        Tt = T
    n_chunks = T // Tt

    h_all = pl.pallas_call(
        decoder_recurrent_kernel,
        out_shape=jax.ShapeDtypeStruct((T * B, H), bf16),        # flat, bf16, lane-dense
        grid=(n_chunks,),
        in_specs=[
            pl.BlockSpec((B, L, F), lambda i: (0, 0, 0)),        # features (loop-invariant)
            pl.BlockSpec((B, L, H), lambda i: (0, 0, 0)),        # e_feat   (loop-invariant)
            pl.BlockSpec((H, 5 * H), lambda i: (0, 0)),          # fused [W_h | W_hh] bf16
            pl.BlockSpec((1, H), lambda i: (0, 0)),              # v.weight row (f32)
            pl.BlockSpec((Tt, B, 4 * H), lambda i: (i, 0, 0)),   # emb_gates chunk (streamed)
            pl.BlockSpec((F, 4 * H), lambda i: (0, 0)),          # W_ic bf16
        ],
        out_specs=pl.BlockSpec((Tt * B, H), lambda i: (i, 0)),   # hidden-state chunk (streamed)
        scratch_shapes=[
            pltpu.VMEM((B, H), jnp.float32),                     # h carry
            pltpu.VMEM((B, H), jnp.float32),                     # c carry
            pltpu.VMEM((Tt * B, H), jnp.float32),                # per-chunk hidden buffer
        ],
        compiler_params=pltpu.CompilerParams(dimension_semantics=("arbitrary",)),
    )(features, e_feat, w_h5, v_row, emb_gates, w_ic_p)

    # ---- (4) vocab projection batched over T*B rows; V padded to a multiple of 128 ----
    V_pad = ((V + 127) // 128) * 128
    w_out = params["w_out"].astype(bf16)
    b_out = params["b_out"]
    if V_pad != V:
        w_out = jnp.pad(w_out, ((0, 0), (0, V_pad - V)))
        b_out = jnp.pad(b_out, ((0, 0), (0, V_pad - V)))

    TB = T * B
    tm = TB if TB <= 256 else 256
    if V_pad % 512 == 0:
        tn = 512
    elif V_pad % 256 == 0:
        tn = 256
    else:
        tn = 128

    logits_pad = pl.pallas_call(
        output_proj_kernel,
        out_shape=jax.ShapeDtypeStruct((TB, V_pad), jnp.float32),
        grid=(pl.cdiv(TB, tm), V_pad // tn),
        in_specs=[
            pl.BlockSpec((tm, H), lambda i, j: (i, 0)),          # hidden states (bf16)
            pl.BlockSpec((H, tn), lambda i, j: (0, j)),          # W_out (bf16, padded)
            pl.BlockSpec((1, tn), lambda i, j: (0, j)),          # b_out (f32, padded)
        ],
        out_specs=pl.BlockSpec((tm, tn), lambda i, j: (i, j)),
        compiler_params=pltpu.CompilerParams(
            dimension_semantics=("parallel", "parallel")),
    )(h_all, w_out, b_out)

    return logits_pad[:, :V].reshape(T, B, V)


# -------------------- pure-JAX reference (mirrors the PyTorch forward) -----------------------
# Matmul operands are cast to bf16 (f32 accumulation) exactly as in the kernels, so the
# comparison checks kernel structure/math rather than bf16-vs-f32 rounding.
def decoder_forward_ref(features, captions, params):
    bf16 = jnp.bfloat16
    emb = params["embed"][captions]                    # (T, B, E)
    T, B, E = emb.shape
    _, L, F = features.shape
    H = params["w_hh"].shape[0]
    h = jnp.zeros((B, H), jnp.float32)
    c = jnp.zeros((B, H), jnp.float32)
    w_att = params["w_att"].astype(bf16)                                      # (F+H, H)
    w_ih = jnp.concatenate([params["w_ie"], params["w_ic"]], 0).astype(bf16)  # (E+F, 4H)
    w_hh = params["w_hh"].astype(bf16)
    w_out = params["w_out"].astype(bf16)
    outs = []
    for t in range(T):
        hid = jnp.broadcast_to(h[:, None, :], (B, L, H))
        concat = jnp.concatenate([features, hid], axis=2)                     # (B, L, F+H)
        energy = jnp.tanh(
            jnp.dot(concat.reshape(B * L, F + H).astype(bf16), w_att,
                    preferred_element_type=jnp.float32).reshape(B, L, H)
            + params["b_att"][0])
        att = (jnp.dot(energy.reshape(B * L, H), params["v_w"],
                       preferred_element_type=jnp.float32).reshape(B, L)
               + params["v_b"][0, 0])                                         # softmax no-op
        alpha = jax.nn.softmax(att, axis=1)
        context = jnp.sum(features * alpha[:, :, None], axis=1)               # (B, F)
        x = jnp.concatenate([emb[t], context], axis=1)                        # (B, E+F)
        gates = (jnp.dot(x.astype(bf16), w_ih, preferred_element_type=jnp.float32)
                 + jnp.dot(h.astype(bf16), w_hh, preferred_element_type=jnp.float32)
                 + params["b_lstm"][0])
        i_g = jax.nn.sigmoid(gates[:, 0 * H:1 * H])
        f_g = jax.nn.sigmoid(gates[:, 1 * H:2 * H])
        g_g = jnp.tanh(gates[:, 2 * H:3 * H])
        o_g = jax.nn.sigmoid(gates[:, 3 * H:4 * H])
        c = f_g * c + i_g * g_g
        h = o_g * jnp.tanh(c)
        outs.append(jnp.dot(h.astype(bf16), w_out, preferred_element_type=jnp.float32)
                    + params["b_out"][0])
    return jnp.stack(outs, axis=0)


# ------------------------------ parameter construction ---------------------------------------
def make_params(key, vocab_size, embed_size, hidden_size, pad_idx=0):
    E, H, V = embed_size, hidden_size, vocab_size
    F = E  # Attention(feature_size=embed_size, hidden_size)
    ks = jax.random.split(key, 12)
    scale = 0.05
    embed = scale * jax.random.normal(ks[0], (V, E), jnp.float32)
    embed = embed.at[pad_idx].set(0.0)                 # nn.Embedding padding_idx behavior
    return dict(
        embed=embed,
        w_att=scale * jax.random.normal(ks[1], (F + H, H), jnp.float32),
        b_att=scale * jax.random.normal(ks[2], (1, H), jnp.float32),
        v_w=scale * jax.random.normal(ks[3], (H, 1), jnp.float32),
        v_b=scale * jax.random.normal(ks[4], (1, 1), jnp.float32),
        w_ie=scale * jax.random.normal(ks[5], (E, 4 * H), jnp.float32),
        w_ic=scale * jax.random.normal(ks[6], (F, 4 * H), jnp.float32),
        w_hh=scale * jax.random.normal(ks[7], (H, 4 * H), jnp.float32),
        b_lstm=scale * jax.random.normal(ks[8], (1, 4 * H), jnp.float32),  # b_ih + b_hh folded
        w_out=scale * jax.random.normal(ks[9], (H, V), jnp.float32),
        b_out=scale * jax.random.normal(ks[10], (1, V), jnp.float32),
    )


if __name__ == "__main__":
    # small shapes consistent with the module (embed_size == feature_size == hidden_size)
    B, L, T = 2, 8, 4
    E = H = 128
    V = 256

    key = jax.random.PRNGKey(0)
    k_par, k_feat, k_cap = jax.random.split(key, 3)

    params = make_params(k_par, vocab_size=V, embed_size=E, hidden_size=H)
    features = jax.random.normal(k_feat, (B, L, E), jnp.float32)
    captions = jax.random.randint(k_cap, (T, B), 0, V, dtype=jnp.int32)

    fwd = jax.jit(decoder_forward)
    out = jax.block_until_ready(fwd(features, captions, params))

    ref = decoder_forward_ref(features, captions, params)
    np.testing.assert_allclose(np.asarray(out), np.asarray(ref), rtol=1e-3, atol=1e-3)

    assert out.shape == (T, B, V)
    print("KERNEL_OK")
</pallas_src>

<mosaic_0001>
module attributes {stable_mosaic.version = 11 : i64} {
  func.func @decoder_recurrent_kernel(%arg0: i32, %arg1: memref<2x8x128xf32, #tpu.memory_space<vmem>>, %arg2: memref<2x8x128xf32, #tpu.memory_space<vmem>>, %arg3: memref<128x640xbf16, #tpu.memory_space<vmem>>, %arg4: memref<1x128xf32, #tpu.memory_space<vmem>>, %arg5: memref<4x2x512xf32, #tpu.memory_space<vmem>>, %arg6: memref<128x512xbf16, #tpu.memory_space<vmem>>, %arg7: memref<8x128xbf16, #tpu.memory_space<vmem>>, %arg8: memref<2x128xf32, #tpu.memory_space<vmem>>, %arg9: memref<2x128xf32, #tpu.memory_space<vmem>>, %arg10: memref<8x128xf32, #tpu.memory_space<vmem>>) attributes {dimension_semantics = [#tpu.dimension_semantics<arbitrary>], iteration_bounds = array<i64: 1>, scalar_prefetch = 0 : i64, scratch_operands = 3 : i64, tpu.core_type = #tpu.core_type<tc>, window_params = [{pipeline_mode = #tpu.pipeline_mode<synchronous>, transform_indices = @transform_0, window_bounds = array<i64: 2, 8, 128>}, {pipeline_mode = #tpu.pipeline_mode<synchronous>, transform_indices = @transform_1, window_bounds = array<i64: 2, 8, 128>}, {pipeline_mode = #tpu.pipeline_mode<synchronous>, transform_indices = @transform_2, window_bounds = array<i64: 128, 640>}, {pipeline_mode = #tpu.pipeline_mode<synchronous>, transform_indices = @transform_3, window_bounds = array<i64: 1, 128>}, {transform_indices = @transform_4, window_bounds = array<i64: 4, 2, 512>}, {pipeline_mode = #tpu.pipeline_mode<synchronous>, transform_indices = @transform_5, window_bounds = array<i64: 128, 512>}, {transform_indices = @transform_6, window_bounds = array<i64: 8, 128>}]} {
    %c0_i32 = arith.constant 0 : i32
    %0 = arith.cmpi eq, %arg0, %c0_i32 : i32
    %1 = arith.extui %0 : i1 to i32
    %c0_i32_0 = arith.constant 0 : i32
    %2 = arith.cmpi ne, %1, %c0_i32_0 : i32
    scf.if %2 {
      %cst_66 = arith.constant 0.000000e+00 : f32
      %202 = vector.broadcast %cst_66 : f32 to vector<2x128xf32>
      %c0_67 = arith.constant 0 : index
      %c0_68 = arith.constant 0 : index
      %203 = vector.load %arg8[%c0_67, %c0_68] : memref<2x128xf32, #tpu.memory_space<vmem>>, vector<2x128xf32>
      tpu.vector_store %arg8[%c0_67, %c0_68], %202 {strides = array<i32>} : memref<2x128xf32, #tpu.memory_space<vmem>>, vector<2x128xf32>,
      %cst_69 = arith.constant 0.000000e+00 : f32
      %204 = vector.broadcast %cst_69 : f32 to vector<2x128xf32>
      %c0_70 = arith.constant 0 : index
      %c0_71 = arith.constant 0 : index
      %205 = vector.load %arg9[%c0_70, %c0_71] : memref<2x128xf32, #tpu.memory_space<vmem>>, vector<2x128xf32>
      tpu.vector_store %arg9[%c0_70, %c0_71], %204 {strides = array<i32>} : memref<2x128xf32, #tpu.memory_space<vmem>>, vector<2x128xf32>,
    } else {
    }
    %c0 = arith.constant 0 : index
    %c0_1 = arith.constant 0 : index
    %c0_2 = arith.constant 0 : index
    %3 = vector.load %arg1[%c0, %c0_1, %c0_2] : memref<2x8x128xf32, #tpu.memory_space<vmem>>, vector<2x8x128xf32>
    %c0_3 = arith.constant 0 : index
    %c0_4 = arith.constant 0 : index
    %c0_5 = arith.constant 0 : index
    %4 = vector.load %arg2[%c0_3, %c0_4, %c0_5] : memref<2x8x128xf32, #tpu.memory_space<vmem>>, vector<2x8x128xf32>
    %c0_6 = arith.constant 0 : index
    %c0_7 = arith.constant 0 : index
    %5 = vector.load %arg3[%c0_6, %c0_7] : memref<128x640xbf16, #tpu.memory_space<vmem>>, vector<128x640xbf16>
    %c0_8 = arith.constant 0 : index
    %c0_9 = arith.constant 0 : index
    %6 = vector.load %arg6[%c0_8, %c0_9] : memref<128x512xbf16, #tpu.memory_space<vmem>>, vector<128x512xbf16>
    %c0_10 = arith.constant 0 : index
    %c0_11 = arith.constant 0 : index
    %7 = vector.load %arg4[%c0_10, %c0_11] : memref<1x128xf32, #tpu.memory_space<vmem>>, vector<1x128xf32>
    %8 = vector.shape_cast %7 : vector<1x128xf32> to vector<1x1x128xf32>
    %9 = vector.shape_cast %8 : vector<1x1x128xf32> to vector<1x1x128xf32>
    %10 = vector.broadcast %9 : vector<1x1x128xf32> to vector<2x8x128xf32>
    %c0_12 = arith.constant 0 : index
    %c0_13 = arith.constant 0 : index
    %11 = vector.load %arg8[%c0_12, %c0_13] : memref<2x128xf32, #tpu.memory_space<vmem>>, vector<2x128xf32>
    %c0_14 = arith.constant 0 : index
    %c0_15 = arith.constant 0 : index
    %12 = vector.load %arg9[%c0_14, %c0_15] : memref<2x128xf32, #tpu.memory_space<vmem>>, vector<2x128xf32>
    %13 = arith.truncf %11 : vector<2x128xf32> to vector<2x128xbf16>
    %cst = arith.constant dense<0.000000e+00> : vector<2x640xf32>
    %14 = tpu.matmul %13, %5, %cst {dimension_numbers = #tpu.dot_dimension_numbers<[1], [0], [0], [1], [0, 0, 1, 1], [], []>} : vector<2x128xbf16>, vector<128x640xbf16>, vector<2x640xf32> -> vector<2x640xf32>
    %15 = vector.extract_strided_slice %14 {offsets = [0, 0], sizes = [2, 128], strides = [1, 1]} : vector<2x640xf32> to vector<2x128xf32>
    %16 = vector.extract_strided_slice %14 {offsets = [0, 128], sizes = [2, 512], strides = [1, 1]} : vector<2x640xf32> to vector<2x512xf32>
    %17 = vector.shape_cast %15 : vector<2x128xf32> to vector<2x1x128xf32>
    %18 = vector.broadcast %17 : vector<2x1x128xf32> to vector<2x8x128xf32>
    %19 = arith.addf %4, %18 : vector<2x8x128xf32>
    %20 = math.tanh %19 : vector<2x8x128xf32>
    %21 = arith.mulf %20, %10 : vector<2x8x128xf32>
    %cst_16 = arith.constant dense<0.000000e+00> : vector<2x8xf32>
    %22 = vector.multi_reduction <add>, %21, %cst_16 [2] : vector<2x8x128xf32> to vector<2x8xf32>
    %cst_17 = arith.constant dense<0xFF800000> : vector<2xf32>
    %23 = vector.multi_reduction <maximumf>, %22, %cst_17 [1] : vector<2x8xf32> to vector<2xf32>
    %24 = vector.shape_cast %23 : vector<2xf32> to vector<2x1xf32>
    %25 = vector.broadcast %24 : vector<2x1xf32> to vector<2x8xf32>
    %26 = arith.subf %22, %25 : vector<2x8xf32>
    %27 = math.exp %26 : vector<2x8xf32>
    %cst_18 = arith.constant dense<0.000000e+00> : vector<2xf32>
    %28 = vector.multi_reduction <add>, %27, %cst_18 [1] : vector<2x8xf32> to vector<2xf32>
    %29 = vector.shape_cast %28 : vector<2xf32> to vector<2x1xf32>
    %30 = vector.broadcast %29 : vector<2x1xf32> to vector<2x8xf32>
    %31 = arith.divf %27, %30 : vector<2x8xf32>
    %32 = vector.shape_cast %31 : vector<2x8xf32> to vector<2x8x1xf32>
    %33 = vector.broadcast %32 : vector<2x8x1xf32> to vector<2x8x128xf32>
    %34 = arith.mulf %3, %33 : vector<2x8x128xf32>
    %cst_19 = arith.constant dense<0.000000e+00> : vector<2x128xf32>
    %35 = vector.multi_reduction <add>, %34, %cst_19 [1] : vector<2x8x128xf32> to vector<2x128xf32>
    %c0_20 = arith.constant 0 : index
    %c0_21 = arith.constant 0 : index
    %c0_22 = arith.constant 0 : index
    %36 = vector.load %arg5[%c0_20, %c0_21, %c0_22] : memref<4x2x512xf32, #tpu.memory_space<vmem>>, vector<1x2x512xf32>
    %37 = vector.shape_cast %36 : vector<1x2x512xf32> to vector<2x512xf32>
    %38 = arith.addf %37, %16 : vector<2x512xf32>
    %39 = arith.truncf %35 : vector<2x128xf32> to vector<2x128xbf16>
    %cst_23 = arith.constant dense<0.000000e+00> : vector<2x512xf32>
    %40 = tpu.matmul %39, %6, %cst_23 {dimension_numbers = #tpu.dot_dimension_numbers<[1], [0], [0], [1], [0, 0, 1, 1], [], []>} : vector<2x128xbf16>, vector<128x512xbf16>, vector<2x512xf32> -> vector<2x512xf32>
    %41 = arith.addf %38, %40 : vector<2x512xf32>
    %42 = vector.extract_strided_slice %41 {offsets = [0, 0], sizes = [2, 384], strides = [1, 1]} : vector<2x512xf32> to vector<2x384xf32>
    %43 = arith.negf %42 : vector<2x384xf32>
    %44 = math.exp %43 : vector<2x384xf32>
    %cst_24 = arith.constant 1.000000e+00 : f32
    %45 = vector.broadcast %cst_24 : f32 to vector<2x384xf32>
    %46 = arith.addf %45, %44 : vector<2x384xf32>
    %47 = arith.divf %45, %46 : vector<2x384xf32>
    %48 = vector.extract_strided_slice %47 {offsets = [0, 0], sizes = [2, 128], strides = [1, 1]} : vector<2x384xf32> to vector<2x128xf32>
    %49 = vector.extract_strided_slice %47 {offsets = [0, 128], sizes = [2, 128], strides = [1, 1]} : vector<2x384xf32> to vector<2x128xf32>
    %50 = vector.extract_strided_slice %47 {offsets = [0, 256], sizes = [2, 128], strides = [1, 1]} : vector<2x384xf32> to vector<2x128xf32>
    %51 = vector.extract_strided_slice %41 {offsets = [0, 384], sizes = [2, 128], strides = [1, 1]} : vector<2x512xf32> to vector<2x128xf32>
    %52 = math.tanh %51 : vector<2x128xf32>
    %53 = arith.mulf %49, %12 : vector<2x128xf32>
    %54 = arith.mulf %48, %52 : vector<2x128xf32>
    %55 = arith.addf %53, %54 : vector<2x128xf32>
    %56 = math.tanh %55 : vector<2x128xf32>
    %57 = arith.mulf %50, %56 : vector<2x128xf32>
    %c0_25 = arith.constant 0 : index
    %c0_26 = arith.constant 0 : index
    %58 = vector.load %arg10[%c0_25, %c0_26] : memref<8x128xf32, #tpu.memory_space<vmem>>, vector<2x128xf32>
    tpu.vector_store %arg10[%c0_25, %c0_26], %57 {strides = array<i32>} : memref<8x128xf32, #tpu.memory_space<vmem>>, vector<2x128xf32>,
    %59 = arith.truncf %57 : vector<2x128xf32> to vector<2x128xbf16>
    %cst_27 = arith.constant dense<0.000000e+00> : vector<2x640xf32>
    %60 = tpu.matmul %59, %5, %cst_27 {dimension_numbers = #tpu.dot_dimension_numbers<[1], [0], [0], [1], [0, 0, 1, 1], [], []>} : vector<2x128xbf16>, vector<128x640xbf16>, vector<2x640xf32> -> vector<2x640xf32>
    %61 = vector.extract_strided_slice %60 {offsets = [0, 0], sizes = [2, 128], strides = [1, 1]} : vector<2x640xf32> to vector<2x128xf32>
    %62 = vector.extract_strided_slice %60 {offsets = [0, 128], sizes = [2, 512], strides = [1, 1]} : vector<2x640xf32> to vector<2x512xf32>
    %63 = vector.shape_cast %61 : vector<2x128xf32> to vector<2x1x128xf32>
    %64 = vector.broadcast %63 : vector<2x1x128xf32> to vector<2x8x128xf32>
    %65 = arith.addf %4, %64 : vector<2x8x128xf32>
    %66 = math.tanh %65 : vector<2x8x128xf32>
    %67 = arith.mulf %66, %10 : vector<2x8x128xf32>
    %cst_28 = arith.constant dense<0.000000e+00> : vector<2x8xf32>
    %68 = vector.multi_reduction <add>, %67, %cst_28 [2] : vector<2x8x128xf32> to vector<2x8xf32>
    %cst_29 = arith.constant dense<0xFF800000> : vector<2xf32>
    %69 = vector.multi_reduction <maximumf>, %68, %cst_29 [1] : vector<2x8xf32> to vector<2xf32>
    %70 = vector.shape_cast %69 : vector<2xf32> to vector<2x1xf32>
    %71 = vector.broadcast %70 : vector<2x1xf32> to vector<2x8xf32>
    %72 = arith.subf %68, %71 : vector<2x8xf32>
    %73 = math.exp %72 : vector<2x8xf32>
    %cst_30 = arith.constant dense<0.000000e+00> : vector<2xf32>
    %74 = vector.multi_reduction <add>, %73, %cst_30 [1] : vector<2x8xf32> to vector<2xf32>
    %75 = vector.shape_cast %74 : vector<2xf32> to vector<2x1xf32>
    %76 = vector.broadcast %75 : vector<2x1xf32> to vector<2x8xf32>
    %77 = arith.divf %73, %76 : vector<2x8xf32>
    %78 = vector.shape_cast %77 : vector<2x8xf32> to vector<2x8x1xf32>
    %79 = vector.broadcast %78 : vector<2x8x1xf32> to vector<2x8x128xf32>
    %80 = arith.mulf %3, %79 : vector<2x8x128xf32>
    %cst_31 = arith.constant dense<0.000000e+00> : vector<2x128xf32>
    %81 = vector.multi_reduction <add>, %80, %cst_31 [1] : vector<2x8x128xf32> to vector<2x128xf32>
    %c1 = arith.constant 1 : index
    %c0_32 = arith.constant 0 : index
    %c0_33 = arith.constant 0 : index
    %82 = vector.load %arg5[%c1, %c0_32, %c0_33] : memref<4x2x512xf32, #tpu.memory_space<vmem>>, vector<1x2x512xf32>
    %83 = vector.shape_cast %82 : vector<1x2x512xf32> to vector<2x512xf32>
    %84 = arith.addf %83, %62 : vector<2x512xf32>
    %85 = arith.truncf %81 : vector<2x128xf32> to vector<2x128xbf16>
    %cst_34 = arith.constant dense<0.000000e+00> : vector<2x512xf32>
    %86 = tpu.matmul %85, %6, %cst_34 {dimension_numbers = #tpu.dot_dimension_numbers<[1], [0], [0], [1], [0, 0, 1, 1], [], []>} : vector<2x128xbf16>, vector<128x512xbf16>, vector<2x512xf32> -> vector<2x512xf32>
    %87 = arith.addf %84, %86 : vector<2x512xf32>
    %88 = vector.extract_strided_slice %87 {offsets = [0, 0], sizes = [2, 384], strides = [1, 1]} : vector<2x512xf32> to vector<2x384xf32>
    %89 = arith.negf %88 : vector<2x384xf32>
    %90 = math.exp %89 : vector<2x384xf32>
    %cst_35 = arith.constant 1.000000e+00 : f32
    %91 = vector.broadcast %cst_35 : f32 to vector<2x384xf32>
    %92 = arith.addf %91, %90 : vector<2x384xf32>
    %93 = arith.divf %91, %92 : vector<2x384xf32>
    %94 = vector.extract_strided_slice %93 {offsets = [0, 0], sizes = [2, 128], strides = [1, 1]} : vector<2x384xf32> to vector<2x128xf32>
    %95 = vector.extract_strided_slice %93 {offsets = [0, 128], sizes = [2, 128], strides = [1, 1]} : vector<2x384xf32> to vector<2x128xf32>
    %96 = vector.extract_strided_slice %93 {offsets = [0, 256], sizes = [2, 128], strides = [1, 1]} : vector<2x384xf32> to vector<2x128xf32>
    %97 = vector.extract_strided_slice %87 {offsets = [0, 384], sizes = [2, 128], strides = [1, 1]} : vector<2x512xf32> to vector<2x128xf32>
    %98 = math.tanh %97 : vector<2x128xf32>
    %99 = arith.mulf %95, %55 : vector<2x128xf32>
    %100 = arith.mulf %94, %98 : vector<2x128xf32>
    %101 = arith.addf %99, %100 : vector<2x128xf32>
    %102 = math.tanh %101 : vector<2x128xf32>
    %103 = arith.mulf %96, %102 : vector<2x128xf32>
    %c2 = arith.constant 2 : index
    %c0_36 = arith.constant 0 : index
    %104 = vector.load %arg10[%c2, %c0_36] : memref<8x128xf32, #tpu.memory_space<vmem>>, vector<2x128xf32>
    tpu.vector_store %arg10[%c2, %c0_36], %103 {strides = array<i32>} : memref<8x128xf32, #tpu.memory_space<vmem>>, vector<2x128xf32>,
    %105 = arith.truncf %103 : vector<2x128xf32> to vector<2x128xbf16>
    %cst_37 = arith.constant dense<0.000000e+00> : vector<2x640xf32>
    %106 = tpu.matmul %105, %5, %cst_37 {dimension_numbers = #tpu.dot_dimension_numbers<[1], [0], [0], [1], [0, 0, 1, 1], [], []>} : vector<2x128xbf16>, vector<128x640xbf16>, vector<2x640xf32> -> vector<2x640xf32>
    %107 = vector.extract_strided_slice %106 {offsets = [0, 0], sizes = [2, 128], strides = [1, 1]} : vector<2x640xf32> to vector<2x128xf32>
    %108 = vector.extract_strided_slice %106 {offsets = [0, 128], sizes = [2, 512], strides = [1, 1]} : vector<2x640xf32> to vector<2x512xf32>
    %109 = vector.shape_cast %107 : vector<2x128xf32> to vector<2x1x128xf32>
    %110 = vector.broadcast %109 : vector<2x1x128xf32> to vector<2x8x128xf32>
    %111 = arith.addf %4, %110 : vector<2x8x128xf32>
    %112 = math.tanh %111 : vector<2x8x128xf32>
    %113 = arith.mulf %112, %10 : vector<2x8x128xf32>
    %cst_38 = arith.constant dense<0.000000e+00> : vector<2x8xf32>
    %114 = vector.multi_reduction <add>, %113, %cst_38 [2] : vector<2x8x128xf32> to vector<2x8xf32>
    %cst_39 = arith.constant dense<0xFF800000> : vector<2xf32>
    %115 = vector.multi_reduction <maximumf>, %114, %cst_39 [1] : vector<2x8xf32> to vector<2xf32>
    %116 = vector.shape_cast %115 : vector<2xf32> to vector<2x1xf32>
    %117 = vector.broadcast %116 : vector<2x1xf32> to vector<2x8xf32>
    %118 = arith.subf %114, %117 : vector<2x8xf32>
    %119 = math.exp %118 : vector<2x8xf32>
    %cst_40 = arith.constant dense<0.000000e+00> : vector<2xf32>
    %120 = vector.multi_reduction <add>, %119, %cst_40 [1] : vector<2x8xf32> to vector<2xf32>
    %121 = vector.shape_cast %120 : vector<2xf32> to vector<2x1xf32>
    %122 = vector.broadcast %121 : vector<2x1xf32> to vector<2x8xf32>
    %123 = arith.divf %119, %122 : vector<2x8xf32>
    %124 = vector.shape_cast %123 : vector<2x8xf32> to vector<2x8x1xf32>
    %125 = vector.broadcast %124 : vector<2x8x1xf32> to vector<2x8x128xf32>
    %126 = arith.mulf %3, %125 : vector<2x8x128xf32>
    %cst_41 = arith.constant dense<0.000000e+00> : vector<2x128xf32>
    %127 = vector.multi_reduction <add>, %126, %cst_41 [1] : vector<2x8x128xf32> to vector<2x128xf32>
    %c2_42 = arith.constant 2 : index
    %c0_43 = arith.constant 0 : index
    %c0_44 = arith.constant 0 : index
    %128 = vector.load %arg5[%c2_42, %c0_43, %c0_44] : memref<4x2x512xf32, #tpu.memory_space<vmem>>, vector<1x2x512xf32>
    %129 = vector.shape_cast %128 : vector<1x2x512xf32> to vector<2x512xf32>
    %130 = arith.addf %129, %108 : vector<2x512xf32>
    %131 = arith.truncf %127 : vector<2x128xf32> to vector<2x128xbf16>
    %cst_45 = arith.constant dense<0.000000e+00> : vector<2x512xf32>
    %132 = tpu.matmul %131, %6, %cst_45 {dimension_numbers = #tpu.dot_dimension_numbers<[1], [0], [0], [1], [0, 0, 1, 1], [], []>} : vector<2x128xbf16>, vector<128x512xbf16>, vector<2x512xf32> -> vector<2x512xf32>
    %133 = arith.addf %130, %132 : vector<2x512xf32>
    %134 = vector.extract_strided_slice %133 {offsets = [0, 0], sizes = [2, 384], strides = [1, 1]} : vector<2x512xf32> to vector<2x384xf32>
    %135 = arith.negf %134 : vector<2x384xf32>
    %136 = math.exp %135 : vector<2x384xf32>
    %cst_46 = arith.constant 1.000000e+00 : f32
    %137 = vector.broadcast %cst_46 : f32 to vector<2x384xf32>
    %138 = arith.addf %137, %136 : vector<2x384xf32>
    %139 = arith.divf %137, %138 : vector<2x384xf32>
    %140 = vector.extract_strided_slice %139 {offsets = [0, 0], sizes = [2, 128], strides = [1, 1]} : vector<2x384xf32> to vector<2x128xf32>
    %141 = vector.extract_strided_slice %139 {offsets = [0, 128], sizes = [2, 128], strides = [1, 1]} : vector<2x384xf32> to vector<2x128xf32>
    %142 = vector.extract_strided_slice %139 {offsets = [0, 256], sizes = [2, 128], strides = [1, 1]} : vector<2x384xf32> to vector<2x128xf32>
    %143 = vector.extract_strided_slice %133 {offsets = [0, 384], sizes = [2, 128], strides = [1, 1]} : vector<2x512xf32> to vector<2x128xf32>
    %144 = math.tanh %143 : vector<2x128xf32>
    %145 = arith.mulf %141, %101 : vector<2x128xf32>
    %146 = arith.mulf %140, %144 : vector<2x128xf32>
    %147 = arith.addf %145, %146 : vector<2x128xf32>
    %148 = math.tanh %147 : vector<2x128xf32>
    %149 = arith.mulf %142, %148 : vector<2x128xf32>
    %c4 = arith.constant 4 : index
    %c0_47 = arith.constant 0 : index
    %150 = vector.load %arg10[%c4, %c0_47] : memref<8x128xf32, #tpu.memory_space<vmem>>, vector<2x128xf32>
    tpu.vector_store %arg10[%c4, %c0_47], %149 {strides = array<i32>} : memref<8x128xf32, #tpu.memory_space<vmem>>, vector<2x128xf32>,
    %151 = arith.truncf %149 : vector<2x128xf32> to vector<2x128xbf16>
    %cst_48 = arith.constant dense<0.000000e+00> : vector<2x640xf32>
    %152 = tpu.matmul %151, %5, %cst_48 {dimension_numbers = #tpu.dot_dimension_numbers<[1], [0], [0], [1], [0, 0, 1, 1], [], []>} : vector<2x128xbf16>, vector<128x640xbf16>, vector<2x640xf32> -> vector<2x640xf32>
    %153 = vector.extract_strided_slice %152 {offsets = [0, 0], sizes = [2, 128], strides = [1, 1]} : vector<2x640xf32> to vector<2x128xf32>
    %154 = vector.extract_strided_slice %152 {offsets = [0, 128], sizes = [2, 512], strides = [1, 1]} : vector<2x640xf32> to vector<2x512xf32>
    %155 = vector.shape_cast %153 : vector<2x128xf32> to vector<2x1x128xf32>
    %156 = vector.broadcast %155 : vector<2x1x128xf32> to vector<2x8x128xf32>
    %157 = arith.addf %4, %156 : vector<2x8x128xf32>
    %158 = math.tanh %157 : vector<2x8x128xf32>
    %159 = arith.mulf %158, %10 : vector<2x8x128xf32>
    %cst_49 = arith.constant dense<0.000000e+00> : vector<2x8xf32>
    %160 = vector.multi_reduction <add>, %159, %cst_49 [2] : vector<2x8x128xf32> to vector<2x8xf32>
    %cst_50 = arith.constant dense<0xFF800000> : vector<2xf32>
    %161 = vector.multi_reduction <maximumf>, %160, %cst_50 [1] : vector<2x8xf32> to vector<2xf32>
    %162 = vector.shape_cast %161 : vector<2xf32> to vector<2x1xf32>
    %163 = vector.broadcast %162 : vector<2x1xf32> to vector<2x8xf32>
    %164 = arith.subf %160, %163 : vector<2x8xf32>
    %165 = math.exp %164 : vector<2x8xf32>
    %cst_51 = arith.constant dense<0.000000e+00> : vector<2xf32>
    %166 = vector.multi_reduction <add>, %165, %cst_51 [1] : vector<2x8xf32> to vector<2xf32>
    %167 = vector.shape_cast %166 : vector<2xf32> to vector<2x1xf32>
    %168 = vector.broadcast %167 : vector<2x1xf32> to vector<2x8xf32>
    %169 = arith.divf %165, %168 : vector<2x8xf32>
    %170 = vector.shape_cast %169 : vector<2x8xf32> to vector<2x8x1xf32>
    %171 = vector.broadcast %170 : vector<2x8x1xf32> to vector<2x8x128xf32>
    %172 = arith.mulf %3, %171 : vector<2x8x128xf32>
    %cst_52 = arith.constant dense<0.000000e+00> : vector<2x128xf32>
    %173 = vector.multi_reduction <add>, %172, %cst_52 [1] : vector<2x8x128xf32> to vector<2x128xf32>
    %c3 = arith.constant 3 : index
    %c0_53 = arith.constant 0 : index
    %c0_54 = arith.constant 0 : index
    %174 = vector.load %arg5[%c3, %c0_53, %c0_54] : memref<4x2x512xf32, #tpu.memory_space<vmem>>, vector<1x2x512xf32>
    %175 = vector.shape_cast %174 : vector<1x2x512xf32> to vector<2x512xf32>
    %176 = arith.addf %175, %154 : vector<2x512xf32>
    %177 = arith.truncf %173 : vector<2x128xf32> to vector<2x128xbf16>
    %cst_55 = arith.constant dense<0.000000e+00> : vector<2x512xf32>
    %178 = tpu.matmul %177, %6, %cst_55 {dimension_numbers = #tpu.dot_dimension_numbers<[1], [0], [0], [1], [0, 0, 1, 1], [], []>} : vector<2x128xbf16>, vector<128x512xbf16>, vector<2x512xf32> -> vector<2x512xf32>
    %179 = arith.addf %176, %178 : vector<2x512xf32>
    %180 = vector.extract_strided_slice %179 {offsets = [0, 0], sizes = [2, 384], strides = [1, 1]} : vector<2x512xf32> to vector<2x384xf32>
    %181 = arith.negf %180 : vector<2x384xf32>
    %182 = math.exp %181 : vector<2x384xf32>
    %cst_56 = arith.constant 1.000000e+00 : f32
    %183 = vector.broadcast %cst_56 : f32 to vector<2x384xf32>
    %184 = arith.addf %183, %182 : vector<2x384xf32>
    %185 = arith.divf %183, %184 : vector<2x384xf32>
    %186 = vector.extract_strided_slice %185 {offsets = [0, 0], sizes = [2, 128], strides = [1, 1]} : vector<2x384xf32> to vector<2x128xf32>
    %187 = vector.extract_strided_slice %185 {offsets = [0, 128], sizes = [2, 128], strides = [1, 1]} : vector<2x384xf32> to vector<2x128xf32>
    %188 = vector.extract_strided_slice %185 {offsets = [0, 256], sizes = [2, 128], strides = [1, 1]} : vector<2x384xf32> to vector<2x128xf32>
    %189 = vector.extract_strided_slice %179 {offsets = [0, 384], sizes = [2, 128], strides = [1, 1]} : vector<2x512xf32> to vector<2x128xf32>
    %190 = math.tanh %189 : vector<2x128xf32>
    %191 = arith.mulf %187, %147 : vector<2x128xf32>
    %192 = arith.mulf %186, %190 : vector<2x128xf32>
    %193 = arith.addf %191, %192 : vector<2x128xf32>
    %194 = math.tanh %193 : vector<2x128xf32>
    %195 = arith.mulf %188, %194 : vector<2x128xf32>
    %c6 = arith.constant 6 : index
    %c0_57 = arith.constant 0 : index
    %196 = vector.load %arg10[%c6, %c0_57] : memref<8x128xf32, #tpu.memory_space<vmem>>, vector<2x128xf32>
    tpu.vector_store %arg10[%c6, %c0_57], %195 {strides = array<i32>} : memref<8x128xf32, #tpu.memory_space<vmem>>, vector<2x128xf32>,
    %c0_58 = arith.constant 0 : index
    %c0_59 = arith.constant 0 : index
    %197 = vector.load %arg8[%c0_58, %c0_59] : memref<2x128xf32, #tpu.memory_space<vmem>>, vector<2x128xf32>
    tpu.vector_store %arg8[%c0_58, %c0_59], %195 {strides = array<i32>} : memref<2x128xf32, #tpu.memory_space<vmem>>, vector<2x128xf32>,
    %c0_60 = arith.constant 0 : index
    %c0_61 = arith.constant 0 : index
    %198 = vector.load %arg9[%c0_60, %c0_61] : memref<2x128xf32, #tpu.memory_space<vmem>>, vector<2x128xf32>
    tpu.vector_store %arg9[%c0_60, %c0_61], %193 {strides = array<i32>} : memref<2x128xf32, #tpu.memory_space<vmem>>, vector<2x128xf32>,
    %c0_62 = arith.constant 0 : index
    %c0_63 = arith.constant 0 : index
    %199 = vector.load %arg10[%c0_62, %c0_63] : memref<8x128xf32, #tpu.memory_space<vmem>>, vector<8x128xf32>
    %200 = arith.truncf %199 : vector<8x128xf32> to vector<8x128xbf16>
    %c0_64 = arith.constant 0 : index
    %c0_65 = arith.constant 0 : index
    %201 = vector.load %arg7[%c0_64, %c0_65] : memref<8x128xbf16, #tpu.memory_space<vmem>>, vector<8x128xbf16>
    tpu.vector_store %arg7[%c0_64, %c0_65], %200 {strides = array<i32>} : memref<8x128xbf16, #tpu.memory_space<vmem>>, vector<8x128xbf16>,
    return
  }
  func.func @transform_0(%arg0: i32) -> (i32, i32, i32) {
    %c0_i32 = arith.constant 0 : i32
    %c0_i32_0 = arith.constant 0 : i32
    %c0_i32_1 = arith.constant 0 : i32
    %c0_i32_2 = arith.constant 0 : i32
    return %c0_i32, %c0_i32_0, %c0_i32_1 : i32, i32, i32
  }
  func.func @transform_1(%arg0: i32) -> (i32, i32, i32) {
    %c0_i32 = arith.constant 0 : i32
    %c0_i32_0 = arith.constant 0 : i32
    %c0_i32_1 = arith.constant 0 : i32
    %c0_i32_2 = arith.constant 0 : i32
    return %c0_i32, %c0_i32_0, %c0_i32_1 : i32, i32, i32
  }
  func.func @transform_2(%arg0: i32) -> (i32, i32) {
    %c0_i32 = arith.constant 0 : i32
    %c0_i32_0 = arith.constant 0 : i32
    %c0_i32_1 = arith.constant 0 : i32
    return %c0_i32, %c0_i32_0 : i32, i32
  }
  func.func @transform_3(%arg0: i32) -> (i32, i32) {
    %c0_i32 = arith.constant 0 : i32
    %c0_i32_0 = arith.constant 0 : i32
    %c0_i32_1 = arith.constant 0 : i32
    return %c0_i32, %c0_i32_0 : i32, i32
  }
  func.func @transform_4(%arg0: i32) -> (i32, i32, i32) {
    %c0_i32 = arith.constant 0 : i32
    %c0_i32_0 = arith.constant 0 : i32
    %c0_i32_1 = arith.constant 0 : i32
    return %arg0, %c0_i32, %c0_i32_0 : i32, i32, i32
  }
  func.func @transform_5(%arg0: i32) -> (i32, i32) {
    %c0_i32 = arith.constant 0 : i32
    %c0_i32_0 = arith.constant 0 : i32
    %c0_i32_1 = arith.constant 0 : i32
    return %c0_i32, %c0_i32_0 : i32, i32
  }
  func.func @transform_6(%arg0: i32) -> (i32, i32) {
    %c0_i32 = arith.constant 0 : i32
    %c0_i32_0 = arith.constant 0 : i32
    return %arg0, %c0_i32 : i32, i32
  }
}

module attributes {stable_mosaic.version = 11 : i64} {
  func.func @output_proj_kernel(%arg0: i32, %arg1: i32, %arg2: memref<8x128xbf16, #tpu.memory_space<vmem>>, %arg3: memref<128x256xbf16, #tpu.memory_space<vmem>>, %arg4: memref<1x256xf32, #tpu.memory_space<vmem>>, %arg5: memref<8x256xf32, #tpu.memory_space<vmem>>) attributes {dimension_semantics = [#tpu.dimension_semantics<parallel>, #tpu.dimension_semantics<parallel>], iteration_bounds = array<i64: 1, 1>, scalar_prefetch = 0 : i64, scratch_operands = 0 : i64, tpu.core_type = #tpu.core_type<tc>, window_params = [{transform_indices = @transform_0, window_bounds = array<i64: 8, 128>}, {transform_indices = @transform_1, window_bounds = array<i64: 128, 256>}, {transform_indices = @transform_2, window_bounds = array<i64: 1, 256>}, {transform_indices = @transform_3, window_bounds = array<i64: 8, 256>}]} {
    %c0 = arith.constant 0 : index
    %c0_0 = arith.constant 0 : index
    %0 = vector.load %arg2[%c0, %c0_0] : memref<8x128xbf16, #tpu.memory_space<vmem>>, vector<8x128xbf16>
    %c0_1 = arith.constant 0 : index
    %c0_2 = arith.constant 0 : index
    %1 = vector.load %arg3[%c0_1, %c0_2] : memref<128x256xbf16, #tpu.memory_space<vmem>>, vector<128x256xbf16>
    %cst = arith.constant dense<0.000000e+00> : vector<8x256xf32>
    %2 = tpu.matmul %0, %1, %cst {dimension_numbers = #tpu.dot_dimension_numbers<[1], [0], [0], [1], [0, 0, 1, 1], [], []>} : vector<8x128xbf16>, vector<128x256xbf16>, vector<8x256xf32> -> vector<8x256xf32>
    %c0_3 = arith.constant 0 : index
    %c0_4 = arith.constant 0 : index
    %3 = vector.load %arg4[%c0_3, %c0_4] : memref<1x256xf32, #tpu.memory_space<vmem>>, vector<1x256xf32>
    %4 = vector.broadcast %3 : vector<1x256xf32> to vector<8x256xf32>
    %5 = arith.addf %2, %4 : vector<8x256xf32>
    %c0_5 = arith.constant 0 : index
    %c0_6 = arith.constant 0 : index
    %6 = vector.load %arg5[%c0_5, %c0_6] : memref<8x256xf32, #tpu.memory_space<vmem>>, vector<8x256xf32>
    tpu.vector_store %arg5[%c0_5, %c0_6], %5 {strides = array<i32>} : memref<8x256xf32, #tpu.memory_space<vmem>>, vector<8x256xf32>,
    return
  }
  func.func @transform_0(%arg0: i32, %arg1: i32) -> (i32, i32) {
    %c0_i32 = arith.constant 0 : i32
    %c0_i32_0 = arith.constant 0 : i32
    return %arg0, %c0_i32 : i32, i32
  }
  func.func @transform_1(%arg0: i32, %arg1: i32) -> (i32, i32) {
    %c0_i32 = arith.constant 0 : i32
    %c0_i32_0 = arith.constant 0 : i32
    return %c0_i32, %arg1 : i32, i32
  }
  func.func @transform_2(%arg0: i32, %arg1: i32) -> (i32, i32) {
    %c0_i32 = arith.constant 0 : i32
    %c0_i32_0 = arith.constant 0 : i32
    return %c0_i32, %arg1 : i32, i32
  }
  func.func @transform_3(%arg0: i32, %arg1: i32) -> (i32, i32) {
    %c0_i32 = arith.constant 0 : i32
    return %arg0, %arg1 : i32, i32
  }
}

</mosaic_0001>

<llo_original>
// kernel: decoder_forward.3
$region0: #{decoder_forward.3}
  #allocation0 [shape = 'u32[]', space=smem, size = 0x4, offset = 0x4, fixed_abs, tag = 'smem constant byte address 0x4 - core index']
  #allocation1 [shape = 'u32[144,128]{1,0:T(1,128)}', space=vmem, size = 0x12000, scoped, tag = 'internal scratch']
  %s0 = inlined_call_operand.vmem [shape: bf16[8,128], index: 0, kind: input, shape index: {}]
  %s1 = inlined_call_operand.vmem [shape: bf16[128,256], index: 1, kind: input, shape index: {}]
  %s2 = inlined_call_operand.vmem [shape: f32[1,256], index: 2, kind: input, shape index: {}]
  %s3 = inlined_call_operand.vmem [shape: f32[8,256], index: 3, kind: output, shape index: {}]
  %s4 = sld [smem:[#allocation0]]
  $region22: #{decoder_forward.3} parent=0
    _
  %s6 = ssub.s32 1, %s4
  %s7 = scalar_select 0, %s6, %s4
  // Predicated region
  $region2: #{decoder_forward.3} parent=0 // pred_check
    _
  $region3: #{decoder_forward.3} parent=0 // pred_check_branch
    %9 = sbr.rel (0) target = $region5
  $region4: #{decoder_forward.3} parent=0 // pred_region
    _
  $region5: #{decoder_forward.3} parent=0 // pred_fallthru
    _
  // Predicated region
  $region6: #{decoder_forward.3} parent=0 // pred_check
    _
  $region7: #{decoder_forward.3} parent=0 // pred_check_branch
    %11 = sbr.rel (0) target = $region9
  $region8: #{decoder_forward.3} parent=0 // pred_region
    _
  $region9: #{decoder_forward.3} parent=0 // pred_fallthru
    _
  // Predicated region
  $region10: #{decoder_forward.3} parent=0 // pred_check
    _
  $region11: #{decoder_forward.3} parent=0 // pred_check_branch
    %13 = sbr.rel (0) target = $region13
  $region12: #{decoder_forward.3} parent=0 // pred_region
    _
  $region13: #{decoder_forward.3} parent=0 // pred_fallthru
    _
  %v15 = vld [vmem:[%s0] sm:$0xf]
  %v16 = vld [vmem:[%s1] sm:$0xff]
  %v17 = vld [vmem:[%s1 + $0x8] sm:$0xff]
  %v18 = vld [vmem:[%s1 + $0x10] sm:$0xff]
  %v19 = vld [vmem:[%s1 + $0x18] sm:$0xff]
  %v20 = vld [vmem:[%s1 + $0x20] sm:$0xff]
  %v21 = vld [vmem:[%s1 + $0x28] sm:$0xff]
  %v22 = vld [vmem:[%s1 + $0x30] sm:$0xff]
  %v23 = vld [vmem:[%s1 + $0x38] sm:$0xff]
  %v24 = vld [vmem:[%s1 + $0x40] sm:$0xff]
  %v25 = vld [vmem:[%s1 + $0x48] sm:$0xff]
  %v26 = vld [vmem:[%s1 + $0x50] sm:$0xff]
  %v27 = vld [vmem:[%s1 + $0x58] sm:$0xff]
  %v28 = vld [vmem:[%s1 + $0x60] sm:$0xff]
  %v29 = vld [vmem:[%s1 + $0x68] sm:$0xff]
  %v30 = vld [vmem:[%s1 + $0x70] sm:$0xff]
  %v31 = vld [vmem:[%s1 + $0x78] sm:$0xff]
  %v32 = vld [vmem:[%s2] sm:$0x3]
  %v34 = vlaneseq
  %v35 = vshrl.u32 %v34, 7
  %v36 = vsub.s32 0, %v35
  %v37 = vrot.slane %v32, %v36
  %v38 = vlaneseq
  %v39 = vshrl.u32 %v38, 7
  %v40 = vsub.s32 1, %v39
  %v41 = vrot.slane %v32, %v40
  %v60 = vunpack.c.l.b16 %v16
  %v61 = vunpack.c.h.b16 %v16
  %v62 = vunpack.c.l.b16 %v17
  %v63 = vunpack.c.h.b16 %v17
  %v64 = vunpack.c.l.b16 %v18
  %v65 = vunpack.c.h.b16 %v18
  %v66 = vunpack.c.l.b16 %v19
  %v67 = vunpack.c.h.b16 %v19
  %v68 = vunpack.c.l.b16 %v20
  %v69 = vunpack.c.h.b16 %v20
  %v70 = vunpack.c.l.b16 %v21
  %v71 = vunpack.c.h.b16 %v21
  %v72 = vunpack.c.l.b16 %v22
  %v73 = vunpack.c.h.b16 %v22
  %v74 = vunpack.c.l.b16 %v23
  %v75 = vunpack.c.h.b16 %v23
  %v76 = vunpack.c.l.b16 %v24
  %v77 = vunpack.c.h.b16 %v24
  %v78 = vunpack.c.l.b16 %v25
  %v79 = vunpack.c.h.b16 %v25
  %v80 = vunpack.c.l.b16 %v26
  %v81 = vunpack.c.h.b16 %v26
  %v82 = vunpack.c.l.b16 %v27
  %v83 = vunpack.c.h.b16 %v27
  %v84 = vunpack.c.l.b16 %v28
  %v85 = vunpack.c.h.b16 %v28
  %v86 = vunpack.c.l.b16 %v29
  %v87 = vunpack.c.h.b16 %v29
  %v88 = vunpack.c.l.b16 %v30
  %v89 = vunpack.c.h.b16 %v30
  %v90 = vunpack.c.l.b16 %v31
  %v91 = vunpack.c.h.b16 %v31
  %v92 = vpack.c.b16 %v62, %v60
  %v93 = vpack.c.b16 %v63, %v61
  %v94 = vpack.c.b16 %v66, %v64
  %v95 = vpack.c.b16 %v67, %v65
  %v96 = vpack.c.b16 %v70, %v68
  %v97 = vpack.c.b16 %v71, %v69
  %v98 = vpack.c.b16 %v74, %v72
  %v99 = vpack.c.b16 %v75, %v73
  %v100 = vpack.c.b16 %v78, %v76
  %v101 = vpack.c.b16 %v79, %v77
  %v102 = vpack.c.b16 %v82, %v80
  %v103 = vpack.c.b16 %v83, %v81
  %v104 = vpack.c.b16 %v86, %v84
  %v105 = vpack.c.b16 %v87, %v85
  %v106 = vpack.c.b16 %v90, %v88
  %v107 = vpack.c.b16 %v91, %v89
  %124 = vmatprep.subr.bf16.mxu0 %v107
  %125 = vmatpush1.bf16.msra.mxu0 %v106
  %126 = vmatprep.subr.bf16.mxu0 %v105
  %127 = vmatpush1.bf16.msra.mxu0 %v104
  %128 = vmatprep.subr.bf16.mxu0 %v103
  %129 = vmatpush1.bf16.msra.mxu0 %v102
  %130 = vmatprep.subr.bf16.mxu0 %v101
  %131 = vmatpush1.bf16.msra.mxu0 %v100
  %132 = vmatprep.subr.bf16.mxu0 %v99
  %133 = vmatpush1.bf16.msra.mxu0 %v98
  %134 = vmatprep.subr.bf16.mxu0 %v97
  %135 = vmatpush1.bf16.msra.mxu0 %v96
  %136 = vmatprep.subr.bf16.mxu0 %v95
  %137 = vmatpush1.bf16.msra.mxu0 %v94
  %138 = vmatprep.subr.bf16.mxu0 %v93
  %139 = vmatpush1.bf16.msra.mxu0 %v92
  %140 = vmatprep.subr.bf16.mxu0 0
  %141 = vmatpush2.bf16.msra.mxu0 0
  %142 = vmatprep.subr.bf16.mxu0 0
  %143 = vmatpush2.bf16.msra.mxu0 0
  %144 = vmatprep.subr.bf16.mxu0 0
  %145 = vmatpush2.bf16.msra.mxu0 0
  %146 = vmatprep.subr.bf16.mxu0 0
  %147 = vmatpush2.bf16.msra.mxu0 0
  %148 = vmatprep.subr.bf16.mxu0 0
  %149 = vmatpush2.bf16.msra.mxu0 0
  %150 = vmatprep.subr.bf16.mxu0 0
  %151 = vmatpush2.bf16.msra.mxu0 0
  %152 = vmatprep.subr.bf16.mxu0 0
  %153 = vmatpush2.bf16.msra.mxu0 0
  %154 = vmatprep.subr.bf16.mxu0 0
  %155 = vmatpush2.bf16.msra.mxu0 0
  %156 = vmatprep.mubr.bf16.mxu0 0
  %157 = vmatmul.mubr.bf16.gmra.mxu0 %v15
  %v158 = vpop.f32.mrf.mxu0
  %v159 = vadd.f32 %v37, %v158
  %v160 = vpop.f32.mrf.mxu0
  %v161 = vadd.f32 %v41, %v160
  %v162 = vpop.f32.mrf.mxu0
  %v163 = vpop.f32.mrf.mxu0
  %164 = vdwg.mxu0
  %165 = vst [vmem:[%s3] sm:$0xff] %v159
  %166 = vst [vmem:[%s3 + $0x8] sm:$0xff] %v161
  // Predicated region
  $region14: #{decoder_forward.3} parent=0 // pred_check
    _
  $region15: #{decoder_forward.3} parent=0 // pred_check_branch
    %168 = sbr.rel (0) target = $region17
  $region16: #{decoder_forward.3} parent=0 // pred_region
    _
  $region17: #{decoder_forward.3} parent=0 // pred_fallthru
    _
  // Predicated region
  $region18: #{decoder_forward.3} parent=0 // pred_check
    _
  $region19: #{decoder_forward.3} parent=0 // pred_check_branch
    %170 = sbr.rel (0) target = $region21
  $region20: #{decoder_forward.3} parent=0 // pred_region
    _
  $region21: #{decoder_forward.3} parent=0 // pred_fallthru
    _

// kernel: decoder_forward.2
$region0: #{decoder_forward.2}
  #allocation0 [shape = 'u32[]', space=smem, size = 0x4, offset = 0x4, fixed_abs, tag = 'smem constant byte address 0x4 - core index']
  #allocation1 [shape = 'u32[144,128]{1,0:T(1,128)}', space=vmem, size = 0x12000, scoped, tag = 'internal scratch']
  #allocation2 [shape = 'f32[2,128]{1,0:T(2,128)}', space=vmem, size = 0x400, scoped, tag = 'scratch operand']
  #allocation3 [shape = 'f32[2,128]{1,0:T(2,128)}', space=vmem, size = 0x400, scoped, tag = 'scratch operand']
  #allocation4 [shape = 'f32[8,128]{1,0:T(8,128)}', space=vmem, size = 0x1000, scoped, tag = 'scratch operand']
  %s0 = inlined_call_operand.vmem [shape: f32[2,8,128], index: 0, kind: input, shape index: {}]
  %s1 = inlined_call_operand.vmem [shape: f32[2,8,128], index: 1, kind: input, shape index: {}]
  %s2 = inlined_call_operand.vmem [shape: bf16[128,640], index: 2, kind: input, shape index: {}]
  %s3 = inlined_call_operand.vmem [shape: f32[1,128], index: 3, kind: input, shape index: {}]
  %s4 = inlined_call_operand.vmem [shape: f32[4,2,512], index: 4, kind: input, shape index: {}]
  %s5 = inlined_call_operand.vmem [shape: bf16[128,512], index: 5, kind: input, shape index: {}]
  %s6 = inlined_call_operand.vmem [shape: bf16[8,128], index: 6, kind: output, shape index: {}]
  %s7 = sld [smem:[#allocation0]]
  $region38: #{decoder_forward.2} parent=0
    _
  %s9 = ssub.s32 1, %s7
  %s10 = scalar_select 0, %s9, %s7
  // Predicated region
  $region2: #{decoder_forward.2} parent=0 // pred_check
    _
  $region3: #{decoder_forward.2} parent=0 // pred_check_branch
    %12 = sbr.rel (0) target = $region5
  $region4: #{decoder_forward.2} parent=0 // pred_region
    _
  $region5: #{decoder_forward.2} parent=0 // pred_fallthru
    _
  // Predicated region
  $region6: #{decoder_forward.2} parent=0 // pred_check
    _
  $region7: #{decoder_forward.2} parent=0 // pred_check_branch
    %14 = sbr.rel (0) target = $region9
  $region8: #{decoder_forward.2} parent=0 // pred_region
    _
  $region9: #{decoder_forward.2} parent=0 // pred_fallthru
    _
  // Predicated region
  $region10: #{decoder_forward.2} parent=0 // pred_check
    _
  $region11: #{decoder_forward.2} parent=0 // pred_check_branch
    %16 = sbr.rel (0) target = $region13
  $region12: #{decoder_forward.2} parent=0 // pred_region
    _
  $region13: #{decoder_forward.2} parent=0 // pred_fallthru
    _
  // Predicated region
  $region14: #{decoder_forward.2} parent=0 // pred_check
    _
  $region15: #{decoder_forward.2} parent=0 // pred_check_branch
    %18 = sbr.rel (0) target = $region17
  $region16: #{decoder_forward.2} parent=0 // pred_region
    _
  $region17: #{decoder_forward.2} parent=0 // pred_fallthru
    _
  // Predicated region
  $region18: #{decoder_forward.2} parent=0 // pred_check
    _
  $region19: #{decoder_forward.2} parent=0 // pred_check_branch
    %20 = sbr.rel (0) target = $region21
  $region20: #{decoder_forward.2} parent=0 // pred_region
    _
  $region21: #{decoder_forward.2} parent=0 // pred_fallthru
    _
  // Predicated region
  $region22: #{decoder_forward.2} parent=0 // pred_check
    _
  $region23: #{decoder_forward.2} parent=0 // pred_check_branch
    %22 = sbr.rel (0) target = $region25
  $region24: #{decoder_forward.2} parent=0 // pred_region
    _
  $region25: #{decoder_forward.2} parent=0 // pred_fallthru
    _
  %p24 = scmp.eq.s32.totalorder 0, 0
  // Predicated region
  $region26: #{decoder_forward.2} parent=0 // pred_check
    %p25 = pneg %p24
  $region27: #{decoder_forward.2} parent=0 // pred_check_branch
    %27 = sbr.rel (%p25) target = $region29
  $region28: #{decoder_forward.2} parent=0 // pred_region
    %28 = vst [vmem:[#allocation2] sm:$0x3] 0.0
    %29 = vst [vmem:[#allocation3] sm:$0x3] 0.0
  $region29: #{decoder_forward.2} parent=0 // pred_fallthru
    _
  %v30 = vld [vmem:[%s0] sm:$0xff]
  %v31 = vld [vmem:[%s0 + $0x8] sm:$0xff]
  %v32 = vld [vmem:[%s1] sm:$0xff]
  %v33 = vld [vmem:[%s1 + $0x8] sm:$0xff]
  %v34 = vld [vmem:[%s2] sm:$0xff]
  %v35 = vld [vmem:[%s2 + $0x8] sm:$0xff]
  %v36 = vld [vmem:[%s2 + $0x10] sm:$0xf]
  %v37 = vld [vmem:[%s2 + $0x14] sm:$0xff]
  %v38 = vld [vmem:[%s2 + $0x1c] sm:$0xff]
  %v39 = vld [vmem:[%s2 + $0x24] sm:$0xf]
  %v40 = vld [vmem:[%s2 + $0x28] sm:$0xff]
  %v41 = vld [vmem:[%s2 + $0x30] sm:$0xff]
  %v42 = vld [vmem:[%s2 + $0x38] sm:$0xf]
  %v43 = vld [vmem:[%s2 + $0x3c] sm:$0xff]
  %v44 = vld [vmem:[%s2 + $0x44] sm:$0xff]
  %v45 = vld [vmem:[%s2 + $0x4c] sm:$0xf]
  %v46 = vld [vmem:[%s2 + $0x50] sm:$0xff]
  %v47 = vld [vmem:[%s2 + $0x58] sm:$0xff]
  %v48 = vld [vmem:[%s2 + $0x60] sm:$0xf]
  %v49 = vld [vmem:[%s2 + $0x64] sm:$0xff]
  %v50 = vld [vmem:[%s2 + $0x6c] sm:$0xff]
  %v51 = vld [vmem:[%s2 + $0x74] sm:$0xf]
  %v52 = vld [vmem:[%s2 + $0x78] sm:$0xff]
  %v53 = vld [vmem:[%s2 + $0x80] sm:$0xff]
  %v54 = vld [vmem:[%s2 + $0x88] sm:$0xf]
  %v55 = vld [vmem:[%s2 + $0x8c] sm:$0xff]
  %v56 = vld [vmem:[%s2 + $0x94] sm:$0xff]
  %v57 = vld [vmem:[%s2 + $0x9c] sm:$0xf]
  %v58 = vld [vmem:[%s2 + $0xa0] sm:$0xff]
  %v59 = vld [vmem:[%s2 + $0xa8] sm:$0xff]
  %v60 = vld [vmem:[%s2 + $0xb0] sm:$0xf]
  %v61 = vld [vmem:[%s2 + $0xb4] sm:$0xff]
  %v62 = vld [vmem:[%s2 + $0xbc] sm:$0xff]
  %v63 = vld [vmem:[%s2 + $0xc4] sm:$0xf]
  %v64 = vld [vmem:[%s2 + $0xc8] sm:$0xff]
  %v65 = vld [vmem:[%s2 + $0xd0] sm:$0xff]
  %v66 = vld [vmem:[%s2 + $0xd8] sm:$0xf]
  %v67 = vld [vmem:[%s2 + $0xdc] sm:$0xff]
  %v68 = vld [vmem:[%s2 + $0xe4] sm:$0xff]
  %v69 = vld [vmem:[%s2 + $0xec] sm:$0xf]
  %v70 = vld [vmem:[%s2 + $0xf0] sm:$0xff]
  %v71 = vld [vmem:[%s2 + $0xf8] sm:$0xff]
  %v72 = vld [vmem:[%s2 + $0x100] sm:$0xf]
  %v73 = vld [vmem:[%s2 + $0x104] sm:$0xff]
  %v74 = vld [vmem:[%s2 + $0x10c] sm:$0xff]
  %v75 = vld [vmem:[%s2 + $0x114] sm:$0xf]
  %v76 = vld [vmem:[%s2 + $0x118] sm:$0xff]
  %v77 = vld [vmem:[%s2 + $0x120] sm:$0xff]
  %v78 = vld [vmem:[%s2 + $0x128] sm:$0xf]
  %v79 = vld [vmem:[%s2 + $0x12c] sm:$0xff]
  %v80 = vld [vmem:[%s2 + $0x134] sm:$0xff]
  %v81 = vld [vmem:[%s2 + $0x13c] sm:$0xf]
  %v82 = vld [vmem:[%s5] sm:$0xff]
  %v83 = vld [vmem:[%s5 + $0x8] sm:$0xff]
  %v84 = vld [vmem:[%s5 + $0x10] sm:$0xff]
  %v85 = vld [vmem:[%s5 + $0x18] sm:$0xff]
  %v86 = vld [vmem:[%s5 + $0x20] sm:$0xff]
  %v87 = vld [vmem:[%s5 + $0x28] sm:$0xff]
  %v88 = vld [vmem:[%s5 + $0x30] sm:$0xff]
  %v89 = vld [vmem:[%s5 + $0x38] sm:$0xff]
  %v90 = vld [vmem:[%s5 + $0x40] sm:$0xff]
  %v91 = vld [vmem:[%s5 + $0x48] sm:$0xff]
  %v92 = vld [vmem:[%s5 + $0x50] sm:$0xff]
  %v93 = vld [vmem:[%s5 + $0x58] sm:$0xff]
  %v94 = vld [vmem:[%s5 + $0x60] sm:$0xff]
  %v95 = vld [vmem:[%s5 + $0x68] sm:$0xff]
  %v96 = vld [vmem:[%s5 + $0x70] sm:$0xff]
  %v97 = vld [vmem:[%s5 + $0x78] sm:$0xff]
  %v98 = vld [vmem:[%s5 + $0x80] sm:$0xff]
  %v99 = vld [vmem:[%s5 + $0x88] sm:$0xff]
  %v100 = vld [vmem:[%s5 + $0x90] sm:$0xff]
  %v101 = vld [vmem:[%s5 + $0x98] sm:$0xff]
  %v102 = vld [vmem:[%s5 + $0xa0] sm:$0xff]
  %v103 = vld [vmem:[%s5 + $0xa8] sm:$0xff]
  %v104 = vld [vmem:[%s5 + $0xb0] sm:$0xff]
  %v105 = vld [vmem:[%s5 + $0xb8] sm:$0xff]
  %v106 = vld [vmem:[%s5 + $0xc0] sm:$0xff]
  %v107 = vld [vmem:[%s5 + $0xc8] sm:$0xff]
  %v108 = vld [vmem:[%s5 + $0xd0] sm:$0xff]
  %v109 = vld [vmem:[%s5 + $0xd8] sm:$0xff]
  %v110 = vld [vmem:[%s5 + $0xe0] sm:$0xff]
  %v111 = vld [vmem:[%s5 + $0xe8] sm:$0xff]
  %v112 = vld [vmem:[%s5 + $0xf0] sm:$0xff]
  %v113 = vld [vmem:[%s5 + $0xf8] sm:$0xff]
  %v114 = vld [vmem:[%s3] sm:$0x1]
  %v116 = vlaneseq
  %v117 = vshrl.u32 %v116, 7
  %v118 = vsub.s32 0, %v117
  %v119 = vrot.slane %v114, %v118
  %v121 = vld [vmem:[#allocation2] sm:$0x3]
  %v122 = vld [vmem:[#allocation3] sm:$0x3]
  %v123 = vpack.c.bf16 %v121, %v121
  %v172 = vunpack.c.l.b16 %v34
  %v173 = vunpack.c.h.b16 %v34
  %v174 = vunpack.c.l.b16 %v35
  %v175 = vunpack.c.h.b16 %v35
  %v176 = vunpack.c.l.b16 %v36
  %v177 = vunpack.c.l.b16 %v37
  %v178 = vunpack.c.h.b16 %v37
  %v179 = vunpack.c.l.b16 %v38
  %v180 = vunpack.c.h.b16 %v38
  %v181 = vunpack.c.l.b16 %v39
  %v182 = vunpack.c.l.b16 %v40
  %v183 = vunpack.c.h.b16 %v40
  %v184 = vunpack.c.l.b16 %v41
  %v185 = vunpack.c.h.b16 %v41
  %v186 = vunpack.c.l.b16 %v42
  %v187 = vunpack.c.l.b16 %v43
  %v188 = vunpack.c.h.b16 %v43
  %v189 = vunpack.c.l.b16 %v44
  %v190 = vunpack.c.h.b16 %v44
  %v191 = vunpack.c.l.b16 %v45
  %v192 = vunpack.c.l.b16 %v46
  %v193 = vunpack.c.h.b16 %v46
  %v194 = vunpack.c.l.b16 %v47
  %v195 = vunpack.c.h.b16 %v47
  %v196 = vunpack.c.l.b16 %v48
  %v197 = vunpack.c.l.b16 %v49
  %v198 = vunpack.c.h.b16 %v49
  %v199 = vunpack.c.l.b16 %v50
  %v200 = vunpack.c.h.b16 %v50
  %v201 = vunpack.c.l.b16 %v51
  %v202 = vunpack.c.l.b16 %v52
  %v203 = vunpack.c.h.b16 %v52
  %v204 = vunpack.c.l.b16 %v53
  %v205 = vunpack.c.h.b16 %v53
  %v206 = vunpack.c.l.b16 %v54
  %v207 = vunpack.c.l.b16 %v55
  %v208 = vunpack.c.h.b16 %v55
  %v209 = vunpack.c.l.b16 %v56
  %v210 = vunpack.c.h.b16 %v56
  %v211 = vunpack.c.l.b16 %v57
  %v212 = vunpack.c.l.b16 %v58
  %v213 = vunpack.c.h.b16 %v58
  %v214 = vunpack.c.l.b16 %v59
  %v215 = vunpack.c.h.b16 %v59
  %v216 = vunpack.c.l.b16 %v60
  %v217 = vunpack.c.l.b16 %v61
  %v218 = vunpack.c.h.b16 %v61
  %v219 = vunpack.c.l.b16 %v62
  %v220 = vunpack.c.h.b16 %v62
  %v221 = vunpack.c.l.b16 %v63
  %v222 = vunpack.c.l.b16 %v64
  %v223 = vunpack.c.h.b16 %v64
  %v224 = vunpack.c.l.b16 %v65
  %v225 = vunpack.c.h.b16 %v65
  %v226 = vunpack.c.l.b16 %v66
  %v227 = vunpack.c.l.b16 %v67
  %v228 = vunpack.c.h.b16 %v67
  %v229 = vunpack.c.l.b16 %v68
  %v230 = vunpack.c.h.b16 %v68
  %v231 = vunpack.c.l.b16 %v69
  %v232 = vunpack.c.l.b16 %v70
  %v233 = vunpack.c.h.b16 %v70
  %v234 = vunpack.c.l.b16 %v71
  %v235 = vunpack.c.h.b16 %v71
  %v236 = vunpack.c.l.b16 %v72
  %v237 = vunpack.c.l.b16 %v73
  %v238 = vunpack.c.h.b16 %v73
  %v239 = vunpack.c.l.b16 %v74
  %v240 = vunpack.c.h.b16 %v74
  %v241 = vunpack.c.l.b16 %v75
  %v242 = vunpack.c.l.b16 %v76
  %v243 = vunpack.c.h.b16 %v76
  %v244 = vunpack.c.l.b16 %v77
  %v245 = vunpack.c.h.b16 %v77
  %v246 = vunpack.c.l.b16 %v78
  %v247 = vunpack.c.l.b16 %v79
  %v248 = vunpack.c.h.b16 %v79
  %v249 = vunpack.c.l.b16 %v80
  %v250 = vunpack.c.h.b16 %v80
  %v251 = vunpack.c.l.b16 %v81
  %v252 = vpack.c.b16 %v177, %v172
  %v253 = vpack.c.b16 %v178, %v173
  %v254 = vpack.c.b16 %v179, %v174
  %v255 = vpack.c.b16 %v180, %v175
  %v256 = vpack.c.b16 %v181, %v176
  %v257 = vpack.c.b16 %v187, %v182
  %v258 = vpack.c.b16 %v188, %v183
  %v259 = vpack.c.b16 %v189, %v184
  %v260 = vpack.c.b16 %v190, %v185
  %v261 = vpack.c.b16 %v191, %v186
  %v262 = vpack.c.b16 %v197, %v192
  %v263 = vpack.c.b16 %v198, %v193
  %v264 = vpack.c.b16 %v199, %v194
  %v265 = vpack.c.b16 %v200, %v195
  %v266 = vpack.c.b16 %v201, %v196
  %v267 = vpack.c.b16 %v207, %v202
  %v268 = vpack.c.b16 %v208, %v203
  %v269 = vpack.c.b16 %v209, %v204
  %v270 = vpack.c.b16 %v210, %v205
  %v271 = vpack.c.b16 %v211, %v206
  %v272 = vpack.c.b16 %v217, %v212
  %v273 = vpack.c.b16 %v218, %v213
  %v274 = vpack.c.b16 %v219, %v214
  %v275 = vpack.c.b16 %v220, %v215
  %v276 = vpack.c.b16 %v221, %v216
  %v277 = vpack.c.b16 %v227, %v222
  %v278 = vpack.c.b16 %v228, %v223
  %v279 = vpack.c.b16 %v229, %v224
  %v280 = vpack.c.b16 %v230, %v225
  %v281 = vpack.c.b16 %v231, %v226
  %v282 = vpack.c.b16 %v237, %v232
  %v283 = vpack.c.b16 %v238, %v233
  %v284 = vpack.c.b16 %v239, %v234
  %v285 = vpack.c.b16 %v240, %v235
  %v286 = vpack.c.b16 %v241, %v236
  %v287 = vpack.c.b16 %v247, %v242
  %v288 = vpack.c.b16 %v248, %v243
  %v289 = vpack.c.b16 %v249, %v244
  %v290 = vpack.c.b16 %v250, %v245
  %v291 = vpack.c.b16 %v251, %v246
  %332 = vmatprep.subr.bf16.mxu0 %v288
  %333 = vmatpush1.bf16.msra.mxu0 %v287
  %334 = vmatprep.subr.bf16.mxu0 %v283
  %335 = vmatpush1.bf16.msra.mxu0 %v282
  %336 = vmatprep.subr.bf16.mxu0 %v278
  %337 = vmatpush1.bf16.msra.mxu0 %v277
  %338 = vmatprep.subr.bf16.mxu0 %v273
  %339 = vmatpush1.bf16.msra.mxu0 %v272
  %340 = vmatprep.subr.bf16.mxu0 %v268
  %341 = vmatpush1.bf16.msra.mxu0 %v267
  %342 = vmatprep.subr.bf16.mxu0 %v263
  %343 = vmatpush1.bf16.msra.mxu0 %v262
  %344 = vmatprep.subr.bf16.mxu0 %v258
  %345 = vmatpush1.bf16.msra.mxu0 %v257
  %346 = vmatprep.subr.bf16.mxu0 %v253
  %347 = vmatpush1.bf16.msra.mxu0 %v252
  %348 = vmatprep.subr.bf16.mxu0 0
  %349 = vmatpush2.bf16.msra.mxu0 0
  %350 = vmatprep.subr.bf16.mxu0 0
  %351 = vmatpush2.bf16.msra.mxu0 0
  %352 = vmatprep.subr.bf16.mxu0 0
  %353 = vmatpush2.bf16.msra.mxu0 0
  %354 = vmatprep.subr.bf16.mxu0 0
  %355 = vmatpush2.bf16.msra.mxu0 0
  %356 = vmatprep.subr.bf16.mxu0 0
  %357 = vmatpush2.bf16.msra.mxu0 0
  %358 = vmatprep.subr.bf16.mxu0 0
  %359 = vmatpush2.bf16.msra.mxu0 0
  %360 = vmatprep.subr.bf16.mxu0 0
  %361 = vmatpush2.bf16.msra.mxu0 0
  %362 = vmatprep.subr.bf16.mxu0 0
  %363 = vmatpush2.bf16.msra.mxu0 0
  %364 = vmatprep.mubr.bf16.mxu0 0
  %365 = vmatmul.mubr.bf16.gmra.mxu0 %v123
  %v366 = vpop.f32.mrf.mxu0
  %v367 = vadd.f32 0.0, %v366
  %v368 = vpop.f32.mrf.mxu0
  %v369 = vadd.f32 0.0, %v368
  %v370 = vpop.f32.mrf.mxu0
  %v371 = vpop.f32.mrf.mxu0
  %372 = vdwg.mxu0
  %373 = vmatprep.subr.bf16.mxu0 %v290
  %374 = vmatpush1.bf16.msra.mxu0 %v289
  %375 = vmatprep.subr.bf16.mxu0 %v285
  %376 = vmatpush1.bf16.msra.mxu0 %v284
  %377 = vmatprep.subr.bf16.mxu0 %v280
  %378 = vmatpush1.bf16.msra.mxu0 %v279
  %379 = vmatprep.subr.bf16.mxu0 %v275
  %380 = vmatpush1.bf16.msra.mxu0 %v274
  %381 = vmatprep.subr.bf16.mxu0 %v270
  %382 = vmatpush1.bf16.msra.mxu0 %v269
  %383 = vmatprep.subr.bf16.mxu0 %v265
  %384 = vmatpush1.bf16.msra.mxu0 %v264
  %385 = vmatprep.subr.bf16.mxu0 %v260
  %386 = vmatpush1.bf16.msra.mxu0 %v259
  %387 = vmatprep.subr.bf16.mxu0 %v255
  %388 = vmatpush1.bf16.msra.mxu0 %v254
  %389 = vmatprep.subr.bf16.mxu0 0
  %390 = vmatpush2.bf16.msra.mxu0 0
  %391 = vmatprep.subr.bf16.mxu0 0
  %392 = vmatpush2.bf16.msra.mxu0 0
  %393 = vmatprep.subr.bf16.mxu0 0
  %394 = vmatpush2.bf16.msra.mxu0 0
  %395 = vmatprep.subr.bf16.mxu0 0
  %396 = vmatpush2.bf16.msra.mxu0 0
  %397 = vmatprep.subr.bf16.mxu0 0
  %398 = vmatpush2.bf16.msra.mxu0 0
  %399 = vmatprep.subr.bf16.mxu0 0
  %400 = vmatpush2.bf16.msra.mxu0 0
  %401 = vmatprep.subr.bf16.mxu0 0
  %402 = vmatpush2.bf16.msra.mxu0 0
  %403 = vmatprep.subr.bf16.mxu0 0
  %404 = vmatpush2.bf16.msra.mxu0 0
  %405 = vmatprep.mubr.bf16.mxu0 0
  %406 = vmatmul.mubr.bf16.gmra.mxu0 %v123
  %v407 = vpop.f32.mrf.mxu0
  %v408 = vadd.f32 0.0, %v407
  %v409 = vpop.f32.mrf.mxu0
  %v410 = vadd.f32 0.0, %v409
  %v411 = vpop.f32.mrf.mxu0
  %v412 = vpop.f32.mrf.mxu0
  %413 = vdwg.mxu0
  %414 = vmatprep.subr.bf16.mxu0 0
  %415 = vmatpush1.bf16.msra.mxu0 %v291
  %416 = vmatprep.subr.bf16.mxu0 0
  %417 = vmatpush1.bf16.msra.mxu0 %v286
  %418 = vmatprep.subr.bf16.mxu0 0
  %419 = vmatpush1.bf16.msra.mxu0 %v281
  %420 = vmatprep.subr.bf16.mxu0 0
  %421 = vmatpush1.bf16.msra.mxu0 %v276
  %422 = vmatprep.subr.bf16.mxu0 0
  %423 = vmatpush1.bf16.msra.mxu0 %v271
  %424 = vmatprep.subr.bf16.mxu0 0
  %425 = vmatpush1.bf16.msra.mxu0 %v266
  %426 = vmatprep.subr.bf16.mxu0 0
  %427 = vmatpush1.bf16.msra.mxu0 %v261
  %428 = vmatprep.subr.bf16.mxu0 0
  %429 = vmatpush1.bf16.msra.mxu0 %v256
  %430 = vmatprep.subr.bf16.mxu0 0
  %431 = vmatpush2.bf16.msra.mxu0 0
  %432 = vmatprep.subr.bf16.mxu0 0
  %433 = vmatpush2.bf16.msra.mxu0 0
  %434 = vmatprep.subr.bf16.mxu0 0
  %435 = vmatpush2.bf16.msra.mxu0 0
  %436 = vmatprep.subr.bf16.mxu0 0
  %437 = vmatpush2.bf16.msra.mxu0 0
  %438 = vmatprep.subr.bf16.mxu0 0
  %439 = vmatpush2.bf16.msra.mxu0 0
  %440 = vmatprep.subr.bf16.mxu0 0
  %441 = vmatpush2.bf16.msra.mxu0 0
  %442 = vmatprep.subr.bf16.mxu0 0
  %443 = vmatpush2.bf16.msra.mxu0 0
  %444 = vmatprep.subr.bf16.mxu0 0
  %445 = vmatpush2.bf16.msra.mxu0 0
  %446 = vmatprep.mubr.bf16.mxu0 0
  %447 = vmatmul.mubr.bf16.gmra.mxu0 %v123
  %v448 = vpop.f32.mrf.mxu0
  %v449 = vadd.f32 0.0, %v448
  %v450 = vpop.f32.mrf.mxu0
  %v451 = vpop.f32.mrf.mxu0
  %v452 = vpop.f32.mrf.mxu0
  %453 = vdwg.mxu0
  %v456 = vunpack.c.l.s4 1966171168
  %v457 = vunpack.c.0.s8 %v456
  %v458 = vlaneseq
  %v459 = vshrl.u32 %v458, 7
  %v460 = vsub.s32 %v457, %v459
  %v461 = vrot.slane %v367, %v460
  %v462 = vcombine.high %v461, %v461
  %v464 = vunpack.c.l.s4 1966171168
  %v465 = vunpack.c.0.s8 %v464
  %v466 = vlaneseq
  %v467 = vshrl.u32 %v466, 7
  %v468 = vsub.s32 %v465, %v467
  %v469 = vrot.slane %v461, %v468
  %v471 = vunpack.c.l.s4 1966171168
  %v472 = vunpack.c.0.s8 %v471
  %v473 = vlaneseq
  %v474 = vshrl.u32 %v473, 7
  %v475 = vsub.s32 %v472, %v474
  %v476 = vrot.slane %v462, %v475
  %v477 = vlaneseq
  %v478 = vshrl.u32 %v477, 7
  %v479 = vsub.s32 0, %v478
  %v480 = vrot.slane %v469, %v479
  %v481 = vlaneseq
  %v482 = vshrl.u32 %v481, 7
  %v483 = vsub.s32 0, %v482
  %v484 = vrot.slane %v476, %v483
  %v487 = vadd.f32 %v32, %v480
  %v488 = vadd.f32 %v33, %v484
  %v489 = vtanh.pop %v487
  %v490 = vtanh.pop %v488
  %v491 = vmul.f32 %v489, %v119
  %v492 = vmul.f32 %v490, %v119
  %493 = vadd.xlane.f32.xlu0 %v491
  %v494 = vpop.xlane.xlu0 %493
  %495 = vadd.xlane.f32.xlu0 %v492
  %v496 = vpop.xlane.xlu0 %495
  %v499 = vlaneseq
  %v500 = vand.u32 %v499, 127
  %v501 = vlaneseq
  %v502 = vshrl.u32 %v501, 7
  %v503 = vsub.s32 %v500, %v502
  %v504 = vrot.slane %v494, %v503
  %v505 = vlaneseq
  %v506 = vshrl.u32 %v505, 7
  %v507 = vsub.s32 %v500, %v506
  %v508 = vrot.slane %v496, %v507
  %vm509 = vcmask 1041409
  %v510 = vsel %vm509, %v508, %v504
  %vm512 = vcmask 58368
  %v513 = vsel %vm512, %v510, -inf
  %514 = vmax.xlane.f32.xlu0 %v513
  %v515 = vpop.xlane.xlu0 %514
  %v517 = vlaneseq
  %v518 = vshrl.u32 %v517, 7
  %v519 = vsub.s32 0, %v518
  %v520 = vrot.slane %v515, %v519
  %v521 = vlaneseq
  %v522 = vshrl.u32 %v521, 7
  %v523 = vsub.s32 1, %v522
  %v524 = vrot.slane %v515, %v523
  %v527 = vsub.f32 %v494, %v520
  %v528 = vsub.f32 %v496, %v524
  %v529 = vmul.f32 %v527, 1.442695
  %v530 = vpow.pop %v529
  %v531 = vmul.f32 %v528, 1.442695
  %v532 = vpow.pop %v531
  %535 = vset.pattern.permute.xlu0 0
  %536 = vperm.xlu0 %535, %v530
  %v537 = vpop.permute.xlu0 %536
  %538 = vset.pattern.permute.xlu0 0
  %539 = vperm.xlu0 %538, %v532
  %v540 = vpop.permute.xlu0 %539
  %v541 = vlaneseq
  %v542 = vshrl.u32 %v541, 7
  %v543 = vsub.s32 %v500, %v542
  %v544 = vrot.slane %v537, %v543
  %v545 = vlaneseq
  %v546 = vshrl.u32 %v545, 7
  %v547 = vsub.s32 %v500, %v546
  %v548 = vrot.slane %v540, %v547
  %v549 = vsel %vm509, %v548, %v544
  %v551 = vsel %vm512, %v549, 0.0
  %552 = vadd.xlane.f32.xlu0 %v551
  %v553 = vpop.xlane.xlu0 %552
  %v555 = vlaneseq
  %v556 = vshrl.u32 %v555, 7
  %v557 = vsub.s32 0, %v556
  %v558 = vrot.slane %v553, %v557
  %v559 = vlaneseq
  %v560 = vshrl.u32 %v559, 7
  %v561 = vsub.s32 1, %v560
  %v562 = vrot.slane %v553, %v561
  %v565 = vrcp.pop %v558
  %v566 = vmul.f32 %v530, %v565
  %v567 = vrcp.pop %v562
  %v568 = vmul.f32 %v532, %v567
  %570 = vset.pattern.permute.xlu0 0
  %571 = vperm.xlu0 %570, %v566
  %v572 = vpop.permute.xlu0 %571
  %575 = vset.pattern.permute.xlu0 0
  %576 = vperm.xlu0 %575, %v568
  %v577 = vpop.permute.xlu0 %576
  %v579 = vmul.f32 %v30, %v572
  %v580 = vmul.f32 %v31, %v577
  %v581 = vrot.slane %v579, 4
  %v582 = vadd.f32 %v579, %v581
  %v583 = vrot.slane %v582, 2
  %v584 = vadd.f32 %v582, %v583
  %v585 = vrot.slane %v584, 1
  %v586 = vadd.f32 %v584, %v585
  %v587 = vrot.slane %v580, 4
  %v588 = vadd.f32 %v580, %v587
  %v589 = vrot.slane %v588, 2
  %v590 = vadd.f32 %v588, %v589
  %v591 = vrot.slane %v590, 1
  %v592 = vadd.f32 %v590, %v591
  %v593 = vld [vmem:[%s4] sm:$0xff]
  %v598 = vcombine.low %v369, %v408
  %v599 = vcombine.low %v410, %v449
  %v601 = vunpack.c.l.s4 1983009808
  %v602 = vunpack.c.0.s8 %v601
  %v603 = vlaneseq
  %v604 = vshrl.u32 %v603, 7
  %v605 = vsub.s32 %v602, %v604
  %v606 = vrot.slane %v598, %v605
  %v608 = vunpack.c.l.s4 1983009808
  %v609 = vunpack.c.0.s8 %v608
  %v610 = vlaneseq
  %v611 = vshrl.u32 %v610, 7
  %v612 = vsub.s32 %v609, %v611
  %v613 = vrot.slane %v599, %v612
  %v614 = vcombine.low %v606, %v613
  %v616 = vadd.f32 %v593, %v614
  %v617 = vpack.c.bf16 %v586, %v586
  %v618 = vpack.c.bf16 %v592, %v592
  %v621 = vunpack.c.l.b16 %v617
  %v622 = vunpack.c.l.b16 %v618
  %v623 = vsel %vm509, %v622, %v621
  %v624 = vpack.c.b16 %v623, %v623
  %v658 = vunpack.c.l.b16 %v82
  %v659 = vunpack.c.h.b16 %v82
  %v660 = vunpack.c.l.b16 %v83
  %v661 = vunpack.c.h.b16 %v83
  %v662 = vunpack.c.l.b16 %v84
  %v663 = vunpack.c.h.b16 %v84
  %v664 = vunpack.c.l.b16 %v85
  %v665 = vunpack.c.h.b16 %v85
  %v666 = vunpack.c.l.b16 %v86
  %v667 = vunpack.c.h.b16 %v86
  %v668 = vunpack.c.l.b16 %v87
  %v669 = vunpack.c.h.b16 %v87
  %v670 = vunpack.c.l.b16 %v88
  %v671 = vunpack.c.h.b16 %v88
  %v672 = vunpack.c.l.b16 %v89
  %v673 = vunpack.c.h.b16 %v89
  %v674 = vunpack.c.l.b16 %v90
  %v675 = vunpack.c.h.b16 %v90
  %v676 = vunpack.c.l.b16 %v91
  %v677 = vunpack.c.h.b16 %v91
  %v678 = vunpack.c.l.b16 %v92
  %v679 = vunpack.c.h.b16 %v92
  %v680 = vunpack.c.l.b16 %v93
  %v681 = vunpack.c.h.b16 %v93
  %v682 = vunpack.c.l.b16 %v94
  %v683 = vunpack.c.h.b16 %v94
  %v684 = vunpack.c.l.b16 %v95
  %v685 = vunpack.c.h.b16 %v95
  %v686 = vunpack.c.l.b16 %v96
  %v687 = vunpack.c.h.b16 %v96
  %v688 = vunpack.c.l.b16 %v97
  %v689 = vunpack.c.h.b16 %v97
  %v690 = vunpack.c.l.b16 %v98
  %v691 = vunpack.c.h.b16 %v98
  %v692 = vunpack.c.l.b16 %v99
  %v693 = vunpack.c.h.b16 %v99
  %v694 = vunpack.c.l.b16 %v100
  %v695 = vunpack.c.h.b16 %v100
  %v696 = vunpack.c.l.b16 %v101
  %v697 = vunpack.c.h.b16 %v101
  %v698 = vunpack.c.l.b16 %v102
  %v699 = vunpack.c.h.b16 %v102
  %v700 = vunpack.c.l.b16 %v103
  %v701 = vunpack.c.h.b16 %v103
  %v702 = vunpack.c.l.b16 %v104
  %v703 = vunpack.c.h.b16 %v104
  %v704 = vunpack.c.l.b16 %v105
  %v705 = vunpack.c.h.b16 %v105
  %v706 = vunpack.c.l.b16 %v106
  %v707 = vunpack.c.h.b16 %v106
  %v708 = vunpack.c.l.b16 %v107
  %v709 = vunpack.c.h.b16 %v107
  %v710 = vunpack.c.l.b16 %v108
  %v711 = vunpack.c.h.b16 %v108
  %v712 = vunpack.c.l.b16 %v109
  %v713 = vunpack.c.h.b16 %v109
  %v714 = vunpack.c.l.b16 %v110
  %v715 = vunpack.c.h.b16 %v110
  %v716 = vunpack.c.l.b16 %v111
  %v717 = vunpack.c.h.b16 %v111
  %v718 = vunpack.c.l.b16 %v112
  %v719 = vunpack.c.h.b16 %v112
  %v720 = vunpack.c.l.b16 %v113
  %v721 = vunpack.c.h.b16 %v113
  %v722 = vpack.c.b16 %v662, %v658
  %v723 = vpack.c.b16 %v663, %v659
  %v724 = vpack.c.b16 %v664, %v660
  %v725 = vpack.c.b16 %v665, %v661
  %v726 = vpack.c.b16 %v670, %v666
  %v727 = vpack.c.b16 %v671, %v667
  %v728 = vpack.c.b16 %v672, %v668
  %v729 = vpack.c.b16 %v673, %v669
  %v730 = vpack.c.b16 %v678, %v674
  %v731 = vpack.c.b16 %v679, %v675
  %v732 = vpack.c.b16 %v680, %v676
  %v733 = vpack.c.b16 %v681, %v677
  %v734 = vpack.c.b16 %v686, %v682
  %v735 = vpack.c.b16 %v687, %v683
  %v736 = vpack.c.b16 %v688, %v684
  %v737 = vpack.c.b16 %v689, %v685
  %v738 = vpack.c.b16 %v694, %v690
  %v739 = vpack.c.b16 %v695, %v691
  %v740 = vpack.c.b16 %v696, %v692
  %v741 = vpack.c.b16 %v697, %v693
  %v742 = vpack.c.b16 %v702, %v698
  %v743 = vpack.c.b16 %v703, %v699
  %v744 = vpack.c.b16 %v704, %v700
  %v745 = vpack.c.b16 %v705, %v701
  %v746 = vpack.c.b16 %v710, %v706
  %v747 = vpack.c.b16 %v711, %v707
  %v748 = vpack.c.b16 %v712, %v708
  %v749 = vpack.c.b16 %v713, %v709
  %v750 = vpack.c.b16 %v718, %v714
  %v751 = vpack.c.b16 %v719, %v715
  %v752 = vpack.c.b16 %v720, %v716
  %v753 = vpack.c.b16 %v721, %v717
  %786 = vmatprep.subr.bf16.mxu0 %v751
  %787 = vmatpush1.bf16.msra.mxu0 %v750
  %788 = vmatprep.subr.bf16.mxu0 %v747
  %789 = vmatpush1.bf16.msra.mxu0 %v746
  %790 = vmatprep.subr.bf16.mxu0 %v743
  %791 = vmatpush1.bf16.msra.mxu0 %v742
  %792 = vmatprep.subr.bf16.mxu0 %v739
  %793 = vmatpush1.bf16.msra.mxu0 %v738
  %794 = vmatprep.subr.bf16.mxu0 %v735
  %795 = vmatpush1.bf16.msra.mxu0 %v734
  %796 = vmatprep.subr.bf16.mxu0 %v731
  %797 = vmatpush1.bf16.msra.mxu0 %v730
  %798 = vmatprep.subr.bf16.mxu0 %v727
  %799 = vmatpush1.bf16.msra.mxu0 %v726
  %800 = vmatprep.subr.bf16.mxu0 %v723
  %801 = vmatpush1.bf16.msra.mxu0 %v722
  %802 = vmatprep.subr.bf16.mxu0 0
  %803 = vmatpush2.bf16.msra.mxu0 0
  %804 = vmatprep.subr.bf16.mxu0 0
  %805 = vmatpush2.bf16.msra.mxu0 0
  %806 = vmatprep.subr.bf16.mxu0 0
  %807 = vmatpush2.bf16.msra.mxu0 0
  %808 = vmatprep.subr.bf16.mxu0 0
  %809 = vmatpush2.bf16.msra.mxu0 0
  %810 = vmatprep.subr.bf16.mxu0 0
  %811 = vmatpush2.bf16.msra.mxu0 0
  %812 = vmatprep.subr.bf16.mxu0 0
  %813 = vmatpush2.bf16.msra.mxu0 0
  %814 = vmatprep.subr.bf16.mxu0 0
  %815 = vmatpush2.bf16.msra.mxu0 0
  %816 = vmatprep.subr.bf16.mxu0 0
  %817 = vmatpush2.bf16.msra.mxu0 0
  %818 = vmatprep.mubr.bf16.mxu0 0
  %819 = vmatmul.mubr.bf16.gmra.mxu0 %v624
  %v820 = vpop.f32.mrf.mxu0
  %v821 = vadd.f32 0.0, %v820
  %v822 = vpop.f32.mrf.mxu0
  %v823 = vadd.f32 0.0, %v822
  %v824 = vpop.f32.mrf.mxu0
  %v825 = vpop.f32.mrf.mxu0
  %826 = vdwg.mxu0
  %827 = vmatprep.subr.bf16.mxu0 %v753
  %828 = vmatpush1.bf16.msra.mxu0 %v752
  %829 = vmatprep.subr.bf16.mxu0 %v749
  %830 = vmatpush1.bf16.msra.mxu0 %v748
  %831 = vmatprep.subr.bf16.mxu0 %v745
  %832 = vmatpush1.bf16.msra.mxu0 %v744
  %833 = vmatprep.subr.bf16.mxu0 %v741
  %834 = vmatpush1.bf16.msra.mxu0 %v740
  %835 = vmatprep.subr.bf16.mxu0 %v737
  %836 = vmatpush1.bf16.msra.mxu0 %v736
  %837 = vmatprep.subr.bf16.mxu0 %v733
  %838 = vmatpush1.bf16.msra.mxu0 %v732
  %839 = vmatprep.subr.bf16.mxu0 %v729
  %840 = vmatpush1.bf16.msra.mxu0 %v728
  %841 = vmatprep.subr.bf16.mxu0 %v725
  %842 = vmatpush1.bf16.msra.mxu0 %v724
  %843 = vmatprep.subr.bf16.mxu0 0
  %844 = vmatpush2.bf16.msra.mxu0 0
  %845 = vmatprep.subr.bf16.mxu0 0
  %846 = vmatpush2.bf16.msra.mxu0 0
  %847 = vmatprep.subr.bf16.mxu0 0
  %848 = vmatpush2.bf16.msra.mxu0 0
  %849 = vmatprep.subr.bf16.mxu0 0
  %850 = vmatpush2.bf16.msra.mxu0 0
  %851 = vmatprep.subr.bf16.mxu0 0
  %852 = vmatpush2.bf16.msra.mxu0 0
  %853 = vmatprep.subr.bf16.mxu0 0
  %854 = vmatpush2.bf16.msra.mxu0 0
  %855 = vmatprep.subr.bf16.mxu0 0
  %856 = vmatpush2.bf16.msra.mxu0 0
  %857 = vmatprep.subr.bf16.mxu0 0
  %858 = vmatpush2.bf16.msra.mxu0 0
  %859 = vmatprep.mubr.bf16.mxu0 0
  %860 = vmatmul.mubr.bf16.gmra.mxu0 %v624
  %v861 = vpop.f32.mrf.mxu0
  %v862 = vadd.f32 0.0, %v861
  %v863 = vpop.f32.mrf.mxu0
  %v864 = vadd.f32 0.0, %v863
  %v865 = vpop.f32.mrf.mxu0
  %v866 = vpop.f32.mrf.mxu0
  %867 = vdwg.mxu0
  %v872 = vcombine.low %v821, %v823
  %v873 = vcombine.low %v862, %v864
  %v875 = vunpack.c.l.s4 1983009808
  %v876 = vunpack.c.0.s8 %v875
  %v877 = vlaneseq
  %v878 = vshrl.u32 %v877, 7
  %v879 = vsub.s32 %v876, %v878
  %v880 = vrot.slane %v872, %v879
  %v882 = vunpack.c.l.s4 1983009808
  %v883 = vunpack.c.0.s8 %v882
  %v884 = vlaneseq
  %v885 = vshrl.u32 %v884, 7
  %v886 = vsub.s32 %v883, %v885
  %v887 = vrot.slane %v873, %v886
  %v888 = vcombine.low %v880, %v887
  %v890 = vadd.f32 %v616, %v888
  %v891 = vxor.u32 %v890, 2147483648
  %v892 = vmul.f32 %v891, 1.442695
  %v893 = vpow.pop %v892
  %v894 = vadd.f32 %v893, 1.0
  %v895 = vrcp.pop %v894
  %v896 = vmul.f32 1.0, %v895
  %v898 = vrot.slane %v890, 6
  %v900 = vtanh.pop %v898
  %v902 = vrot.slane %v896, 2
  %v904 = vmul.f32 %v902, %v122
  %v905 = vmul.f32 %v896, %v900
  %v906 = vadd.f32 %v904, %v905
  %v907 = vtanh.pop %v906
  %v908 = vrot.slane %v896, 4
  %v910 = vmul.f32 %v908, %v907
  %911 = vst [vmem:[#allocation4] sm:$0x3] %v910
  %v912 = vpack.c.bf16 %v910, %v910
  %913 = vmatprep.subr.bf16.mxu0 %v288
  %914 = vmatpush1.bf16.msra.mxu0 %v287
  %915 = vmatprep.subr.bf16.mxu0 %v283
  %916 = vmatpush1.bf16.msra.mxu0 %v282
  %917 = vmatprep.subr.bf16.mxu0 %v278
  %918 = vmatpush1.bf16.msra.mxu0 %v277
  %919 = vmatprep.subr.bf16.mxu0 %v273
  %920 = vmatpush1.bf16.msra.mxu0 %v272
  %921 = vmatprep.subr.bf16.mxu0 %v268
  %922 = vmatpush1.bf16.msra.mxu0 %v267
  %923 = vmatprep.subr.bf16.mxu0 %v263
  %924 = vmatpush1.bf16.msra.mxu0 %v262
  %925 = vmatprep.subr.bf16.mxu0 %v258
  %926 = vmatpush1.bf16.msra.mxu0 %v257
  %927 = vmatprep.subr.bf16.mxu0 %v253
  %928 = vmatpush1.bf16.msra.mxu0 %v252
  %929 = vmatprep.subr.bf16.mxu0 0
  %930 = vmatpush2.bf16.msra.mxu0 0
  %931 = vmatprep.subr.bf16.mxu0 0
  %932 = vmatpush2.bf16.msra.mxu0 0
  %933 = vmatprep.subr.bf16.mxu0 0
  %934 = vmatpush2.bf16.msra.mxu0 0
  %935 = vmatprep.subr.bf16.mxu0 0
  %936 = vmatpush2.bf16.msra.mxu0 0
  %937 = vmatprep.subr.bf16.mxu0 0
  %938 = vmatpush2.bf16.msra.mxu0 0
  %939 = vmatprep.subr.bf16.mxu0 0
  %940 = vmatpush2.bf16.msra.mxu0 0
  %941 = vmatprep.subr.bf16.mxu0 0
  %942 = vmatpush2.bf16.msra.mxu0 0
  %943 = vmatprep.subr.bf16.mxu0 0
  %944 = vmatpush2.bf16.msra.mxu0 0
  %945 = vmatprep.mubr.bf16.mxu0 0
  %946 = vmatmul.mubr.bf16.gmra.mxu0 %v912
  %v947 = vpop.f32.mrf.mxu0
  %v948 = vadd.f32 0.0, %v947
  %v949 = vpop.f32.mrf.mxu0
  %v950 = vadd.f32 0.0, %v949
  %v951 = vpop.f32.mrf.mxu0
  %v952 = vpop.f32.mrf.mxu0
  %953 = vdwg.mxu0
  %954 = vmatprep.subr.bf16.mxu0 %v290
  %955 = vmatpush1.bf16.msra.mxu0 %v289
  %956 = vmatprep.subr.bf16.mxu0 %v285
  %957 = vmatpush1.bf16.msra.mxu0 %v284
  %958 = vmatprep.subr.bf16.mxu0 %v280
  %959 = vmatpush1.bf16.msra.mxu0 %v279
  %960 = vmatprep.subr.bf16.mxu0 %v275
  %961 = vmatpush1.bf16.msra.mxu0 %v274
  %962 = vmatprep.subr.bf16.mxu0 %v270
  %963 = vmatpush1.bf16.msra.mxu0 %v269
  %964 = vmatprep.subr.bf16.mxu0 %v265
  %965 = vmatpush1.bf16.msra.mxu0 %v264
  %966 = vmatprep.subr.bf16.mxu0 %v260
  %967 = vmatpush1.bf16.msra.mxu0 %v259
  %968 = vmatprep.subr.bf16.mxu0 %v255
  %969 = vmatpush1.bf16.msra.mxu0 %v254
  %970 = vmatprep.subr.bf16.mxu0 0
  %971 = vmatpush2.bf16.msra.mxu0 0
  %972 = vmatprep.subr.bf16.mxu0 0
  %973 = vmatpush2.bf16.msra.mxu0 0
  %974 = vmatprep.subr.bf16.mxu0 0
  %975 = vmatpush2.bf16.msra.mxu0 0
  %976 = vmatprep.subr.bf16.mxu0 0
  %977 = vmatpush2.bf16.msra.mxu0 0
  %978 = vmatprep.subr.bf16.mxu0 0
  %979 = vmatpush2.bf16.msra.mxu0 0
  %980 = vmatprep.subr.bf16.mxu0 0
  %981 = vmatpush2.bf16.msra.mxu0 0
  %982 = vmatprep.subr.bf16.mxu0 0
  %983 = vmatpush2.bf16.msra.mxu0 0
  %984 = vmatprep.subr.bf16.mxu0 0
  %985 = vmatpush2.bf16.msra.mxu0 0
  %986 = vmatprep.mubr.bf16.mxu0 0
  %987 = vmatmul.mubr.bf16.gmra.mxu0 %v912
  %v988 = vpop.f32.mrf.mxu0
  %v989 = vadd.f32 0.0, %v988
  %v990 = vpop.f32.mrf.mxu0
  %v991 = vadd.f32 0.0, %v990
  %v992 = vpop.f32.mrf.mxu0
  %v993 = vpop.f32.mrf.mxu0
  %994 = vdwg.mxu0
  %995 = vmatprep.subr.bf16.mxu0 0
  %996 = vmatpush1.bf16.msra.mxu0 %v291
  %997 = vmatprep.subr.bf16.mxu0 0
  %998 = vmatpush1.bf16.msra.mxu0 %v286
  %999 = vmatprep.subr.bf16.mxu0 0
  %1000 = vmatpush1.bf16.msra.mxu0 %v281
  %1001 = vmatprep.subr.bf16.mxu0 0
  %1002 = vmatpush1.bf16.msra.mxu0 %v276
  %1003 = vmatprep.subr.bf16.mxu0 0
  %1004 = vmatpush1.bf16.msra.mxu0 %v271
  %1005 = vmatprep.subr.bf16.mxu0 0
  %1006 = vmatpush1.bf16.msra.mxu0 %v266
  %1007 = vmatprep.subr.bf16.mxu0 0
  %1008 = vmatpush1.bf16.msra.mxu0 %v261
  %1009 = vmatprep.subr.bf16.mxu0 0
  %1010 = vmatpush1.bf16.msra.mxu0 %v256
  %1011 = vmatprep.subr.bf16.mxu0 0
  %1012 = vmatpush2.bf16.msra.mxu0 0
  %1013 = vmatprep.subr.bf16.mxu0 0
  %1014 = vmatpush2.bf16.msra.mxu0 0
  %1015 = vmatprep.subr.bf16.mxu0 0
  %1016 = vmatpush2.bf16.msra.mxu0 0
  %1017 = vmatprep.subr.bf16.mxu0 0
  %1018 = vmatpush2.bf16.msra.mxu0 0
  %1019 = vmatprep.subr.bf16.mxu0 0
  %1020 = vmatpush2.bf16.msra.mxu0 0
  %1021 = vmatprep.subr.bf16.mxu0 0
  %1022 = vmatpush2.bf16.msra.mxu0 0
  %1023 = vmatprep.subr.bf16.mxu0 0
  %1024 = vmatpush2.bf16.msra.mxu0 0
  %1025 = vmatprep.subr.bf16.mxu0 0
  %1026 = vmatpush2.bf16.msra.mxu0 0
  %1027 = vmatprep.mubr.bf16.mxu0 0
  %1028 = vmatmul.mubr.bf16.gmra.mxu0 %v912
  %v1029 = vpop.f32.mrf.mxu0
  %v1030 = vadd.f32 0.0, %v1029
  %v1031 = vpop.f32.mrf.mxu0
  %v1032 = vpop.f32.mrf.mxu0
  %v1033 = vpop.f32.mrf.mxu0
  %1034 = vdwg.mxu0
  %v1037 = vunpack.c.l.s4 1966171168
  %v1038 = vunpack.c.0.s8 %v1037
  %v1039 = vlaneseq
  %v1040 = vshrl.u32 %v1039, 7
  %v1041 = vsub.s32 %v1038, %v1040
  %v1042 = vrot.slane %v948, %v1041
  %v1043 = vcombine.high %v1042, %v1042
  %v1045 = vunpack.c.l.s4 1966171168
  %v1046 = vunpack.c.0.s8 %v1045
  %v1047 = vlaneseq
  %v1048 = vshrl.u32 %v1047, 7
  %v1049 = vsub.s32 %v1046, %v1048
  %v1050 = vrot.slane %v1042, %v1049
  %v1052 = vunpack.c.l.s4 1966171168
  %v1053 = vunpack.c.0.s8 %v1052
  %v1054 = vlaneseq
  %v1055 = vshrl.u32 %v1054, 7
  %v1056 = vsub.s32 %v1053, %v1055
  %v1057 = vrot.slane %v1043, %v1056
  %v1058 = vlaneseq
  %v1059 = vshrl.u32 %v1058, 7
  %v1060 = vsub.s32 0, %v1059
  %v1061 = vrot.slane %v1050, %v1060
  %v1062 = vlaneseq
  %v1063 = vshrl.u32 %v1062, 7
  %v1064 = vsub.s32 0, %v1063
  %v1065 = vrot.slane %v1057, %v1064
  %v1068 = vadd.f32 %v32, %v1061
  %v1069 = vadd.f32 %v33, %v1065
  %v1070 = vtanh.pop %v1068
  %v1071 = vtanh.pop %v1069
  %v1072 = vmul.f32 %v1070, %v119
  %v1073 = vmul.f32 %v1071, %v119
  %1074 = vadd.xlane.f32.xlu0 %v1072
  %v1075 = vpop.xlane.xlu0 %1074
  %1076 = vadd.xlane.f32.xlu0 %v1073
  %v1077 = vpop.xlane.xlu0 %1076
  %v1080 = vlaneseq
  %v1081 = vshrl.u32 %v1080, 7
  %v1082 = vsub.s32 %v500, %v1081
  %v1083 = vrot.slane %v1075, %v1082
  %v1084 = vlaneseq
  %v1085 = vshrl.u32 %v1084, 7
  %v1086 = vsub.s32 %v500, %v1085
  %v1087 = vrot.slane %v1077, %v1086
  %v1088 = vsel %vm509, %v1087, %v1083
  %v1090 = vsel %vm512, %v1088, -inf
  %1091 = vmax.xlane.f32.xlu0 %v1090
  %v1092 = vpop.xlane.xlu0 %1091
  %v1094 = vlaneseq
  %v1095 = vshrl.u32 %v1094, 7
  %v1096 = vsub.s32 0, %v1095
  %v1097 = vrot.slane %v1092, %v1096
  %v1098 = vlaneseq
  %v1099 = vshrl.u32 %v1098, 7
  %v1100 = vsub.s32 1, %v1099
  %v1101 = vrot.slane %v1092, %v1100
  %v1104 = vsub.f32 %v1075, %v1097
  %v1105 = vsub.f32 %v1077, %v1101
  %v1106 = vmul.f32 %v1104, 1.442695
  %v1107 = vpow.pop %v1106
  %v1108 = vmul.f32 %v1105, 1.442695
  %v1109 = vpow.pop %v1108
  %1112 = vset.pattern.permute.xlu0 0
  %1113 = vperm.xlu0 %1112, %v1107
  %v1114 = vpop.permute.xlu0 %1113
  %1115 = vset.pattern.permute.xlu0 0
  %1116 = vperm.xlu0 %1115, %v1109
  %v1117 = vpop.permute.xlu0 %1116
  %v1118 = vlaneseq
  %v1119 = vshrl.u32 %v1118, 7
  %v1120 = vsub.s32 %v500, %v1119
  %v1121 = vrot.slane %v1114, %v1120
  %v1122 = vlaneseq
  %v1123 = vshrl.u32 %v1122, 7
  %v1124 = vsub.s32 %v500, %v1123
  %v1125 = vrot.slane %v1117, %v1124
  %v1126 = vsel %vm509, %v1125, %v1121
  %v1128 = vsel %vm512, %v1126, 0.0
  %1129 = vadd.xlane.f32.xlu0 %v1128
  %v1130 = vpop.xlane.xlu0 %1129
  %v1132 = vlaneseq
  %v1133 = vshrl.u32 %v1132, 7
  %v1134 = vsub.s32 0, %v1133
  %v1135 = vrot.slane %v1130, %v1134
  %v1136 = vlaneseq
  %v1137 = vshrl.u32 %v1136, 7
  %v1138 = vsub.s32 1, %v1137
  %v1139 = vrot.slane %v1130, %v1138
  %v1142 = vrcp.pop %v1135
  %v1143 = vmul.f32 %v1107, %v1142
  %v1144 = vrcp.pop %v1139
  %v1145 = vmul.f32 %v1109, %v1144
  %1147 = vset.pattern.permute.xlu0 0
  %1148 = vperm.xlu0 %1147, %v1143
  %v1149 = vpop.permute.xlu0 %1148
  %1152 = vset.pattern.permute.xlu0 0
  %1153 = vperm.xlu0 %1152, %v1145
  %v1154 = vpop.permute.xlu0 %1153
  %v1156 = vmul.f32 %v30, %v1149
  %v1157 = vmul.f32 %v31, %v1154
  %v1158 = vrot.slane %v1156, 4
  %v1159 = vadd.f32 %v1156, %v1158
  %v1160 = vrot.slane %v1159, 2
  %v1161 = vadd.f32 %v1159, %v1160
  %v1162 = vrot.slane %v1161, 1
  %v1163 = vadd.f32 %v1161, %v1162
  %v1164 = vrot.slane %v1157, 4
  %v1165 = vadd.f32 %v1157, %v1164
  %v1166 = vrot.slane %v1165, 2
  %v1167 = vadd.f32 %v1165, %v1166
  %v1168 = vrot.slane %v1167, 1
  %v1169 = vadd.f32 %v1167, %v1168
  %s1170 = scalar_lea.vmem %s4, 8
  %v1171 = vld [vmem:[%s1170] sm:$0xff]
  %v1176 = vcombine.low %v950, %v989
  %v1177 = vcombine.low %v991, %v1030
  %v1179 = vunpack.c.l.s4 1983009808
  %v1180 = vunpack.c.0.s8 %v1179
  %v1181 = vlaneseq
  %v1182 = vshrl.u32 %v1181, 7
  %v1183 = vsub.s32 %v1180, %v1182
  %v1184 = vrot.slane %v1176, %v1183
  %v1186 = vunpack.c.l.s4 1983009808
  %v1187 = vunpack.c.0.s8 %v1186
  %v1188 = vlaneseq
  %v1189 = vshrl.u32 %v1188, 7
  %v1190 = vsub.s32 %v1187, %v1189
  %v1191 = vrot.slane %v1177, %v1190
  %v1192 = vcombine.low %v1184, %v1191
  %v1194 = vadd.f32 %v1171, %v1192
  %v1195 = vpack.c.bf16 %v1163, %v1163
  %v1196 = vpack.c.bf16 %v1169, %v1169
  %v1199 = vunpack.c.l.b16 %v1195
  %v1200 = vunpack.c.l.b16 %v1196
  %v1201 = vsel %vm509, %v1200, %v1199
  %v1202 = vpack.c.b16 %v1201, %v1201
  %1204 = vmatprep.subr.bf16.mxu0 %v751
  %1205 = vmatpush1.bf16.msra.mxu0 %v750
  %1206 = vmatprep.subr.bf16.mxu0 %v747
  %1207 = vmatpush1.bf16.msra.mxu0 %v746
  %1208 = vmatprep.subr.bf16.mxu0 %v743
  %1209 = vmatpush1.bf16.msra.mxu0 %v742
  %1210 = vmatprep.subr.bf16.mxu0 %v739
  %1211 = vmatpush1.bf16.msra.mxu0 %v738
  %1212 = vmatprep.subr.bf16.mxu0 %v735
  %1213 = vmatpush1.bf16.msra.mxu0 %v734
  %1214 = vmatprep.subr.bf16.mxu0 %v731
  %1215 = vmatpush1.bf16.msra.mxu0 %v730
  %1216 = vmatprep.subr.bf16.mxu0 %v727
  %1217 = vmatpush1.bf16.msra.mxu0 %v726
  %1218 = vmatprep.subr.bf16.mxu0 %v723
  %1219 = vmatpush1.bf16.msra.mxu0 %v722
  %1220 = vmatprep.subr.bf16.mxu0 0
  %1221 = vmatpush2.bf16.msra.mxu0 0
  %1222 = vmatprep.subr.bf16.mxu0 0
  %1223 = vmatpush2.bf16.msra.mxu0 0
  %1224 = vmatprep.subr.bf16.mxu0 0
  %1225 = vmatpush2.bf16.msra.mxu0 0
  %1226 = vmatprep.subr.bf16.mxu0 0
  %1227 = vmatpush2.bf16.msra.mxu0 0
  %1228 = vmatprep.subr.bf16.mxu0 0
  %1229 = vmatpush2.bf16.msra.mxu0 0
  %1230 = vmatprep.subr.bf16.mxu0 0
  %1231 = vmatpush2.bf16.msra.mxu0 0
  %1232 = vmatprep.subr.bf16.mxu0 0
  %1233 = vmatpush2.bf16.msra.mxu0 0
  %1234 = vmatprep.subr.bf16.mxu0 0
  %1235 = vmatpush2.bf16.msra.mxu0 0
  %1236 = vmatprep.mubr.bf16.mxu0 0
  %1237 = vmatmul.mubr.bf16.gmra.mxu0 %v1202
  %v1238 = vpop.f32.mrf.mxu0
  %v1239 = vadd.f32 0.0, %v1238
  %v1240 = vpop.f32.mrf.mxu0
  %v1241 = vadd.f32 0.0, %v1240
  %v1242 = vpop.f32.mrf.mxu0
  %v1243 = vpop.f32.mrf.mxu0
  %1244 = vdwg.mxu0
  %1245 = vmatprep.subr.bf16.mxu0 %v753
  %1246 = vmatpush1.bf16.msra.mxu0 %v752
  %1247 = vmatprep.subr.bf16.mxu0 %v749
  %1248 = vmatpush1.bf16.msra.mxu0 %v748
  %1249 = vmatprep.subr.bf16.mxu0 %v745
  %1250 = vmatpush1.bf16.msra.mxu0 %v744
  %1251 = vmatprep.subr.bf16.mxu0 %v741
  %1252 = vmatpush1.bf16.msra.mxu0 %v740
  %1253 = vmatprep.subr.bf16.mxu0 %v737
  %1254 = vmatpush1.bf16.msra.mxu0 %v736
  %1255 = vmatprep.subr.bf16.mxu0 %v733
  %1256 = vmatpush1.bf16.msra.mxu0 %v732
  %1257 = vmatprep.subr.bf16.mxu0 %v729
  %1258 = vmatpush1.bf16.msra.mxu0 %v728
  %1259 = vmatprep.subr.bf16.mxu0 %v725
  %1260 = vmatpush1.bf16.msra.mxu0 %v724
  %1261 = vmatprep.subr.bf16.mxu0 0
  %1262 = vmatpush2.bf16.msra.mxu0 0
  %1263 = vmatprep.subr.bf16.mxu0 0
  %1264 = vmatpush2.bf16.msra.mxu0 0
  %1265 = vmatprep.subr.bf16.mxu0 0
  %1266 = vmatpush2.bf16.msra.mxu0 0
  %1267 = vmatprep.subr.bf16.mxu0 0
  %1268 = vmatpush2.bf16.msra.mxu0 0
  %1269 = vmatprep.subr.bf16.mxu0 0
  %1270 = vmatpush2.bf16.msra.mxu0 0
  %1271 = vmatprep.subr.bf16.mxu0 0
  %1272 = vmatpush2.bf16.msra.mxu0 0
  %1273 = vmatprep.subr.bf16.mxu0 0
  %1274 = vmatpush2.bf16.msra.mxu0 0
  %1275 = vmatprep.subr.bf16.mxu0 0
  %1276 = vmatpush2.bf16.msra.mxu0 0
  %1277 = vmatprep.mubr.bf16.mxu0 0
  %1278 = vmatmul.mubr.bf16.gmra.mxu0 %v1202
  %v1279 = vpop.f32.mrf.mxu0
  %v1280 = vadd.f32 0.0, %v1279
  %v1281 = vpop.f32.mrf.mxu0
  %v1282 = vadd.f32 0.0, %v1281
  %v1283 = vpop.f32.mrf.mxu0
  %v1284 = vpop.f32.mrf.mxu0
  %1285 = vdwg.mxu0
  %v1290 = vcombine.low %v1239, %v1241
  %v1291 = vcombine.low %v1280, %v1282
  %v1293 = vunpack.c.l.s4 1983009808
  %v1294 = vunpack.c.0.s8 %v1293
  %v1295 = vlaneseq
  %v1296 = vshrl.u32 %v1295, 7
  %v1297 = vsub.s32 %v1294, %v1296
  %v1298 = vrot.slane %v1290, %v1297
  %v1300 = vunpack.c.l.s4 1983009808
  %v1301 = vunpack.c.0.s8 %v1300
  %v1302 = vlaneseq
  %v1303 = vshrl.u32 %v1302, 7
  %v1304 = vsub.s32 %v1301, %v1303
  %v1305 = vrot.slane %v1291, %v1304
  %v1306 = vcombine.low %v1298, %v1305
  %v1308 = vadd.f32 %v1194, %v1306
  %v1309 = vxor.u32 %v1308, 2147483648
  %v1310 = vmul.f32 %v1309, 1.442695
  %v1311 = vpow.pop %v1310
  %v1312 = vadd.f32 %v1311, 1.0
  %v1313 = vrcp.pop %v1312
  %v1314 = vmul.f32 1.0, %v1313
  %v1316 = vrot.slane %v1308, 6
  %v1318 = vtanh.pop %v1316
  %v1320 = vrot.slane %v1314, 2
  %v1322 = vmul.f32 %v1320, %v906
  %v1323 = vmul.f32 %v1314, %v1318
  %v1324 = vadd.f32 %v1322, %v1323
  %v1325 = vtanh.pop %v1324
  %v1326 = vrot.slane %v1314, 4
  %v1328 = vmul.f32 %v1326, %v1325
  %1329 = vst [vmem:[#allocation4 + $0x2] sm:$0x3] %v1328
  %v1330 = vpack.c.bf16 %v1328, %v1328
  %1331 = vmatprep.subr.bf16.mxu0 %v288
  %1332 = vmatpush1.bf16.msra.mxu0 %v287
  %1333 = vmatprep.subr.bf16.mxu0 %v283
  %1334 = vmatpush1.bf16.msra.mxu0 %v282
  %1335 = vmatprep.subr.bf16.mxu0 %v278
  %1336 = vmatpush1.bf16.msra.mxu0 %v277
  %1337 = vmatprep.subr.bf16.mxu0 %v273
  %1338 = vmatpush1.bf16.msra.mxu0 %v272
  %1339 = vmatprep.subr.bf16.mxu0 %v268
  %1340 = vmatpush1.bf16.msra.mxu0 %v267
  %1341 = vmatprep.subr.bf16.mxu0 %v263
  %1342 = vmatpush1.bf16.msra.mxu0 %v262
  %1343 = vmatprep.subr.bf16.mxu0 %v258
  %1344 = vmatpush1.bf16.msra.mxu0 %v257
  %1345 = vmatprep.subr.bf16.mxu0 %v253
  %1346 = vmatpush1.bf16.msra.mxu0 %v252
  %1347 = vmatprep.subr.bf16.mxu0 0
  %1348 = vmatpush2.bf16.msra.mxu0 0
  %1349 = vmatprep.subr.bf16.mxu0 0
  %1350 = vmatpush2.bf16.msra.mxu0 0
  %1351 = vmatprep.subr.bf16.mxu0 0
  %1352 = vmatpush2.bf16.msra.mxu0 0
  %1353 = vmatprep.subr.bf16.mxu0 0
  %1354 = vmatpush2.bf16.msra.mxu0 0
  %1355 = vmatprep.subr.bf16.mxu0 0
  %1356 = vmatpush2.bf16.msra.mxu0 0
  %1357 = vmatprep.subr.bf16.mxu0 0
  %1358 = vmatpush2.bf16.msra.mxu0 0
  %1359 = vmatprep.subr.bf16.mxu0 0
  %1360 = vmatpush2.bf16.msra.mxu0 0
  %1361 = vmatprep.subr.bf16.mxu0 0
  %1362 = vmatpush2.bf16.msra.mxu0 0
  %1363 = vmatprep.mubr.bf16.mxu0 0
  %1364 = vmatmul.mubr.bf16.gmra.mxu0 %v1330
  %v1365 = vpop.f32.mrf.mxu0
  %v1366 = vadd.f32 0.0, %v1365
  %v1367 = vpop.f32.mrf.mxu0
  %v1368 = vadd.f32 0.0, %v1367
  %v1369 = vpop.f32.mrf.mxu0
  %v1370 = vpop.f32.mrf.mxu0
  %1371 = vdwg.mxu0
  %1372 = vmatprep.subr.bf16.mxu0 %v290
  %1373 = vmatpush1.bf16.msra.mxu0 %v289
  %1374 = vmatprep.subr.bf16.mxu0 %v285
  %1375 = vmatpush1.bf16.msra.mxu0 %v284
  %1376 = vmatprep.subr.bf16.mxu0 %v280
  %1377 = vmatpush1.bf16.msra.mxu0 %v279
  %1378 = vmatprep.subr.bf16.mxu0 %v275
  %1379 = vmatpush1.bf16.msra.mxu0 %v274
  %1380 = vmatprep.subr.bf16.mxu0 %v270
  %1381 = vmatpush1.bf16.msra.mxu0 %v269
  %1382 = vmatprep.subr.bf16.mxu0 %v265
  %1383 = vmatpush1.bf16.msra.mxu0 %v264
  %1384 = vmatprep.subr.bf16.mxu0 %v260
  %1385 = vmatpush1.bf16.msra.mxu0 %v259
  %1386 = vmatprep.subr.bf16.mxu0 %v255
  %1387 = vmatpush1.bf16.msra.mxu0 %v254
  %1388 = vmatprep.subr.bf16.mxu0 0
  %1389 = vmatpush2.bf16.msra.mxu0 0
  %1390 = vmatprep.subr.bf16.mxu0 0
  %1391 = vmatpush2.bf16.msra.mxu0 0
  %1392 = vmatprep.subr.bf16.mxu0 0
  %1393 = vmatpush2.bf16.msra.mxu0 0
  %1394 = vmatprep.subr.bf16.mxu0 0
  %1395 = vmatpush2.bf16.msra.mxu0 0
  %1396 = vmatprep.subr.bf16.mxu0 0
  %1397 = vmatpush2.bf16.msra.mxu0 0
  %1398 = vmatprep.subr.bf16.mxu0 0
  %1399 = vmatpush2.bf16.msra.mxu0 0
  %1400 = vmatprep.subr.bf16.mxu0 0
  %1401 = vmatpush2.bf16.msra.mxu0 0
  %1402 = vmatprep.subr.bf16.mxu0 0
  %1403 = vmatpush2.bf16.msra.mxu0 0
  %1404 = vmatprep.mubr.bf16.mxu0 0
  %1405 = vmatmul.mubr.bf16.gmra.mxu0 %v1330
  %v1406 = vpop.f32.mrf.mxu0
  %v1407 = vadd.f32 0.0, %v1406
  %v1408 = vpop.f32.mrf.mxu0
  %v1409 = vadd.f32 0.0, %v1408
  %v1410 = vpop.f32.mrf.mxu0
  %v1411 = vpop.f32.mrf.mxu0
  %1412 = vdwg.mxu0
  %1413 = vmatprep.subr.bf16.mxu0 0
  %1414 = vmatpush1.bf16.msra.mxu0 %v291
  %1415 = vmatprep.subr.bf16.mxu0 0
  %1416 = vmatpush1.bf16.msra.mxu0 %v286
  %1417 = vmatprep.subr.bf16.mxu0 0
  %1418 = vmatpush1.bf16.msra.mxu0 %v281
  %1419 = vmatprep.subr.bf16.mxu0 0
  %1420 = vmatpush1.bf16.msra.mxu0 %v276
  %1421 = vmatprep.subr.bf16.mxu0 0
  %1422 = vmatpush1.bf16.msra.mxu0 %v271
  %1423 = vmatprep.subr.bf16.mxu0 0
  %1424 = vmatpush1.bf16.msra.mxu0 %v266
  %1425 = vmatprep.subr.bf16.mxu0 0
  %1426 = vmatpush1.bf16.msra.mxu0 %v261
  %1427 = vmatprep.subr.bf16.mxu0 0
  %1428 = vmatpush1.bf16.msra.mxu0 %v256
  %1429 = vmatprep.subr.bf16.mxu0 0
  %1430 = vmatpush2.bf16.msra.mxu0 0
  %1431 = vmatprep.subr.bf16.mxu0 0
  %1432 = vmatpush2.bf16.msra.mxu0 0
  %1433 = vmatprep.subr.bf16.mxu0 0
  %1434 = vmatpush2.bf16.msra.mxu0 0
  %1435 = vmatprep.subr.bf16.mxu0 0
  %1436 = vmatpush2.bf16.msra.mxu0 0
  %1437 = vmatprep.subr.bf16.mxu0 0
  %1438 = vmatpush2.bf16.msra.mxu0 0
  %1439 = vmatprep.subr.bf16.mxu0 0
  %1440 = vmatpush2.bf16.msra.mxu0 0
  %1441 = vmatprep.subr.bf16.mxu0 0
  %1442 = vmatpush2.bf16.msra.mxu0 0
  %1443 = vmatprep.subr.bf16.mxu0 0
  %1444 = vmatpush2.bf16.msra.mxu0 0
  %1445 = vmatprep.mubr.bf16.mxu0 0
  %1446 = vmatmul.mubr.bf16.gmra.mxu0 %v1330
  %v1447 = vpop.f32.mrf.mxu0
  %v1448 = vadd.f32 0.0, %v1447
  %v1449 = vpop.f32.mrf.mxu0
  %v1450 = vpop.f32.mrf.mxu0
  %v1451 = vpop.f32.mrf.mxu0
  %1452 = vdwg.mxu0
  %v1455 = vunpack.c.l.s4 1966171168
  %v1456 = vunpack.c.0.s8 %v1455
  %v1457 = vlaneseq
  %v1458 = vshrl.u32 %v1457, 7
  %v1459 = vsub.s32 %v1456, %v1458
  %v1460 = vrot.slane %v1366, %v1459
  %v1461 = vcombine.high %v1460, %v1460
  %v1463 = vunpack.c.l.s4 1966171168
  %v1464 = vunpack.c.0.s8 %v1463
  %v1465 = vlaneseq
  %v1466 = vshrl.u32 %v1465, 7
  %v1467 = vsub.s32 %v1464, %v1466
  %v1468 = vrot.slane %v1460, %v1467
  %v1470 = vunpack.c.l.s4 1966171168
  %v1471 = vunpack.c.0.s8 %v1470
  %v1472 = vlaneseq
  %v1473 = vshrl.u32 %v1472, 7
  %v1474 = vsub.s32 %v1471, %v1473
  %v1475 = vrot.slane %v1461, %v1474
  %v1476 = vlaneseq
  %v1477 = vshrl.u32 %v1476, 7
  %v1478 = vsub.s32 0, %v1477
  %v1479 = vrot.slane %v1468, %v1478
  %v1480 = vlaneseq
  %v1481 = vshrl.u32 %v1480, 7
  %v1482 = vsub.s32 0, %v1481
  %v1483 = vrot.slane %v1475, %v1482
  %v1486 = vadd.f32 %v32, %v1479
  %v1487 = vadd.f32 %v33, %v1483
  %v1488 = vtanh.pop %v1486
  %v1489 = vtanh.pop %v1487
  %v1490 = vmul.f32 %v1488, %v119
  %v1491 = vmul.f32 %v1489, %v119
  %1492 = vadd.xlane.f32.xlu0 %v1490
  %v1493 = vpop.xlane.xlu0 %1492
  %1494 = vadd.xlane.f32.xlu0 %v1491
  %v1495 = vpop.xlane.xlu0 %1494
  %v1498 = vlaneseq
  %v1499 = vshrl.u32 %v1498, 7
  %v1500 = vsub.s32 %v500, %v1499
  %v1501 = vrot.slane %v1493, %v1500
  %v1502 = vlaneseq
  %v1503 = vshrl.u32 %v1502, 7
  %v1504 = vsub.s32 %v500, %v1503
  %v1505 = vrot.slane %v1495, %v1504
  %v1506 = vsel %vm509, %v1505, %v1501
  %v1508 = vsel %vm512, %v1506, -inf
  %1509 = vmax.xlane.f32.xlu0 %v1508
  %v1510 = vpop.xlane.xlu0 %1509
  %v1512 = vlaneseq
  %v1513 = vshrl.u32 %v1512, 7
  %v1514 = vsub.s32 0, %v1513
  %v1515 = vrot.slane %v1510, %v1514
  %v1516 = vlaneseq
  %v1517 = vshrl.u32 %v1516, 7
  %v1518 = vsub.s32 1, %v1517
  %v1519 = vrot.slane %v1510, %v1518
  %v1522 = vsub.f32 %v1493, %v1515
  %v1523 = vsub.f32 %v1495, %v1519
  %v1524 = vmul.f32 %v1522, 1.442695
  %v1525 = vpow.pop %v1524
  %v1526 = vmul.f32 %v1523, 1.442695
  %v1527 = vpow.pop %v1526
  %1530 = vset.pattern.permute.xlu0 0
  %1531 = vperm.xlu0 %1530, %v1525
  %v1532 = vpop.permute.xlu0 %1531
  %1533 = vset.pattern.permute.xlu0 0
  %1534 = vperm.xlu0 %1533, %v1527
  %v1535 = vpop.permute.xlu0 %1534
  %v1536 = vlaneseq
  %v1537 = vshrl.u32 %v1536, 7
  %v1538 = vsub.s32 %v500, %v1537
  %v1539 = vrot.slane %v1532, %v1538
  %v1540 = vlaneseq
  %v1541 = vshrl.u32 %v1540, 7
  %v1542 = vsub.s32 %v500, %v1541
  %v1543 = vrot.slane %v1535, %v1542
  %v1544 = vsel %vm509, %v1543, %v1539
  %v1546 = vsel %vm512, %v1544, 0.0
  %1547 = vadd.xlane.f32.xlu0 %v1546
  %v1548 = vpop.xlane.xlu0 %1547
  %v1550 = vlaneseq
  %v1551 = vshrl.u32 %v1550, 7
  %v1552 = vsub.s32 0, %v1551
  %v1553 = vrot.slane %v1548, %v1552
  %v1554 = vlaneseq
  %v1555 = vshrl.u32 %v1554, 7
  %v1556 = vsub.s32 1, %v1555
  %v1557 = vrot.slane %v1548, %v1556
  %v1560 = vrcp.pop %v1553
  %v1561 = vmul.f32 %v1525, %v1560
  %v1562 = vrcp.pop %v1557
  %v1563 = vmul.f32 %v1527, %v1562
  %1565 = vset.pattern.permute.xlu0 0
  %1566 = vperm.xlu0 %1565, %v1561
  %v1567 = vpop.permute.xlu0 %1566
  %1570 = vset.pattern.permute.xlu0 0
  %1571 = vperm.xlu0 %1570, %v1563
  %v1572 = vpop.permute.xlu0 %1571
  %v1574 = vmul.f32 %v30, %v1567
  %v1575 = vmul.f32 %v31, %v1572
  %v1576 = vrot.slane %v1574, 4
  %v1577 = vadd.f32 %v1574, %v1576
  %v1578 = vrot.slane %v1577, 2
  %v1579 = vadd.f32 %v1577, %v1578
  %v1580 = vrot.slane %v1579, 1
  %v1581 = vadd.f32 %v1579, %v1580
  %v1582 = vrot.slane %v1575, 4
  %v1583 = vadd.f32 %v1575, %v1582
  %v1584 = vrot.slane %v1583, 2
  %v1585 = vadd.f32 %v1583, %v1584
  %v1586 = vrot.slane %v1585, 1
  %v1587 = vadd.f32 %v1585, %v1586
  %s1588 = scalar_lea.vmem %s4, 16
  %v1589 = vld [vmem:[%s1588] sm:$0xff]
  %v1594 = vcombine.low %v1368, %v1407
  %v1595 = vcombine.low %v1409, %v1448
  %v1597 = vunpack.c.l.s4 1983009808
  %v1598 = vunpack.c.0.s8 %v1597
  %v1599 = vlaneseq
  %v1600 = vshrl.u32 %v1599, 7
  %v1601 = vsub.s32 %v1598, %v1600
  %v1602 = vrot.slane %v1594, %v1601
  %v1604 = vunpack.c.l.s4 1983009808
  %v1605 = vunpack.c.0.s8 %v1604
  %v1606 = vlaneseq
  %v1607 = vshrl.u32 %v1606, 7
  %v1608 = vsub.s32 %v1605, %v1607
  %v1609 = vrot.slane %v1595, %v1608
  %v1610 = vcombine.low %v1602, %v1609
  %v1612 = vadd.f32 %v1589, %v1610
  %v1613 = vpack.c.bf16 %v1581, %v1581
  %v1614 = vpack.c.bf16 %v1587, %v1587
  %v1617 = vunpack.c.l.b16 %v1613
  %v1618 = vunpack.c.l.b16 %v1614
  %v1619 = vsel %vm509, %v1618, %v1617
  %v1620 = vpack.c.b16 %v1619, %v1619
  %1622 = vmatprep.subr.bf16.mxu0 %v751
  %1623 = vmatpush1.bf16.msra.mxu0 %v750
  %1624 = vmatprep.subr.bf16.mxu0 %v747
  %1625 = vmatpush1.bf16.msra.mxu0 %v746
  %1626 = vmatprep.subr.bf16.mxu0 %v743
  %1627 = vmatpush1.bf16.msra.mxu0 %v742
  %1628 = vmatprep.subr.bf16.mxu0 %v739
  %1629 = vmatpush1.bf16.msra.mxu0 %v738
  %1630 = vmatprep.subr.bf16.mxu0 %v735
  %1631 = vmatpush1.bf16.msra.mxu0 %v734
  %1632 = vmatprep.subr.bf16.mxu0 %v731
  %1633 = vmatpush1.bf16.msra.mxu0 %v730
  %1634 = vmatprep.subr.bf16.mxu0 %v727
  %1635 = vmatpush1.bf16.msra.mxu0 %v726
  %1636 = vmatprep.subr.bf16.mxu0 %v723
  %1637 = vmatpush1.bf16.msra.mxu0 %v722
  %1638 = vmatprep.subr.bf16.mxu0 0
  %1639 = vmatpush2.bf16.msra.mxu0 0
  %1640 = vmatprep.subr.bf16.mxu0 0
  %1641 = vmatpush2.bf16.msra.mxu0 0
  %1642 = vmatprep.subr.bf16.mxu0 0
  %1643 = vmatpush2.bf16.msra.mxu0 0
  %1644 = vmatprep.subr.bf16.mxu0 0
  %1645 = vmatpush2.bf16.msra.mxu0 0
  %1646 = vmatprep.subr.bf16.mxu0 0
  %1647 = vmatpush2.bf16.msra.mxu0 0
  %1648 = vmatprep.subr.bf16.mxu0 0
  %1649 = vmatpush2.bf16.msra.mxu0 0
  %1650 = vmatprep.subr.bf16.mxu0 0
  %1651 = vmatpush2.bf16.msra.mxu0 0
  %1652 = vmatprep.subr.bf16.mxu0 0
  %1653 = vmatpush2.bf16.msra.mxu0 0
  %1654 = vmatprep.mubr.bf16.mxu0 0
  %1655 = vmatmul.mubr.bf16.gmra.mxu0 %v1620
  %v1656 = vpop.f32.mrf.mxu0
  %v1657 = vadd.f32 0.0, %v1656
  %v1658 = vpop.f32.mrf.mxu0
  %v1659 = vadd.f32 0.0, %v1658
  %v1660 = vpop.f32.mrf.mxu0
  %v1661 = vpop.f32.mrf.mxu0
  %1662 = vdwg.mxu0
  %1663 = vmatprep.subr.bf16.mxu0 %v753
  %1664 = vmatpush1.bf16.msra.mxu0 %v752
  %1665 = vmatprep.subr.bf16.mxu0 %v749
  %1666 = vmatpush1.bf16.msra.mxu0 %v748
  %1667 = vmatprep.subr.bf16.mxu0 %v745
  %1668 = vmatpush1.bf16.msra.mxu0 %v744
  %1669 = vmatprep.subr.bf16.mxu0 %v741
  %1670 = vmatpush1.bf16.msra.mxu0 %v740
  %1671 = vmatprep.subr.bf16.mxu0 %v737
  %1672 = vmatpush1.bf16.msra.mxu0 %v736
  %1673 = vmatprep.subr.bf16.mxu0 %v733
  %1674 = vmatpush1.bf16.msra.mxu0 %v732
  %1675 = vmatprep.subr.bf16.mxu0 %v729
  %1676 = vmatpush1.bf16.msra.mxu0 %v728
  %1677 = vmatprep.subr.bf16.mxu0 %v725
  %1678 = vmatpush1.bf16.msra.mxu0 %v724
  %1679 = vmatprep.subr.bf16.mxu0 0
  %1680 = vmatpush2.bf16.msra.mxu0 0
  %1681 = vmatprep.subr.bf16.mxu0 0
  %1682 = vmatpush2.bf16.msra.mxu0 0
  %1683 = vmatprep.subr.bf16.mxu0 0
  %1684 = vmatpush2.bf16.msra.mxu0 0
  %1685 = vmatprep.subr.bf16.mxu0 0
  %1686 = vmatpush2.bf16.msra.mxu0 0
  %1687 = vmatprep.subr.bf16.mxu0 0
  %1688 = vmatpush2.bf16.msra.mxu0 0
  %1689 = vmatprep.subr.bf16.mxu0 0
  %1690 = vmatpush2.bf16.msra.mxu0 0
  %1691 = vmatprep.subr.bf16.mxu0 0
  %1692 = vmatpush2.bf16.msra.mxu0 0
  %1693 = vmatprep.subr.bf16.mxu0 0
  %1694 = vmatpush2.bf16.msra.mxu0 0
  %1695 = vmatprep.mubr.bf16.mxu0 0
  %1696 = vmatmul.mubr.bf16.gmra.mxu0 %v1620
  %v1697 = vpop.f32.mrf.mxu0
  %v1698 = vadd.f32 0.0, %v1697
  %v1699 = vpop.f32.mrf.mxu0
  %v1700 = vadd.f32 0.0, %v1699
  %v1701 = vpop.f32.mrf.mxu0
  %v1702 = vpop.f32.mrf.mxu0
  %1703 = vdwg.mxu0
  %v1708 = vcombine.low %v1657, %v1659
  %v1709 = vcombine.low %v1698, %v1700
  %v1711 = vunpack.c.l.s4 1983009808
  %v1712 = vunpack.c.0.s8 %v1711
  %v1713 = vlaneseq
  %v1714 = vshrl.u32 %v1713, 7
  %v1715 = vsub.s32 %v1712, %v1714
  %v1716 = vrot.slane %v1708, %v1715
  %v1718 = vunpack.c.l.s4 1983009808
  %v1719 = vunpack.c.0.s8 %v1718
  %v1720 = vlaneseq
  %v1721 = vshrl.u32 %v1720, 7
  %v1722 = vsub.s32 %v1719, %v1721
  %v1723 = vrot.slane %v1709, %v1722
  %v1724 = vcombine.low %v1716, %v1723
  %v1726 = vadd.f32 %v1612, %v1724
  %v1727 = vxor.u32 %v1726, 2147483648
  %v1728 = vmul.f32 %v1727, 1.442695
  %v1729 = vpow.pop %v1728
  %v1730 = vadd.f32 %v1729, 1.0
  %v1731 = vrcp.pop %v1730
  %v1732 = vmul.f32 1.0, %v1731
  %v1734 = vrot.slane %v1726, 6
  %v1736 = vtanh.pop %v1734
  %v1738 = vrot.slane %v1732, 2
  %v1740 = vmul.f32 %v1738, %v1324
  %v1741 = vmul.f32 %v1732, %v1736
  %v1742 = vadd.f32 %v1740, %v1741
  %v1743 = vtanh.pop %v1742
  %v1744 = vrot.slane %v1732, 4
  %v1746 = vmul.f32 %v1744, %v1743
  %1747 = vst [vmem:[#allocation4 + $0x4] sm:$0x3] %v1746
  %v1748 = vpack.c.bf16 %v1746, %v1746
  %1749 = vmatprep.subr.bf16.mxu0 %v288
  %1750 = vmatpush1.bf16.msra.mxu0 %v287
  %1751 = vmatprep.subr.bf16.mxu0 %v283
  %1752 = vmatpush1.bf16.msra.mxu0 %v282
  %1753 = vmatprep.subr.bf16.mxu0 %v278
  %1754 = vmatpush1.bf16.msra.mxu0 %v277
  %1755 = vmatprep.subr.bf16.mxu0 %v273
  %1756 = vmatpush1.bf16.msra.mxu0 %v272
  %1757 = vmatprep.subr.bf16.mxu0 %v268
  %1758 = vmatpush1.bf16.msra.mxu0 %v267
  %1759 = vmatprep.subr.bf16.mxu0 %v263
  %1760 = vmatpush1.bf16.msra.mxu0 %v262
  %1761 = vmatprep.subr.bf16.mxu0 %v258
  %1762 = vmatpush1.bf16.msra.mxu0 %v257
  %1763 = vmatprep.subr.bf16.mxu0 %v253
  %1764 = vmatpush1.bf16.msra.mxu0 %v252
  %1765 = vmatprep.subr.bf16.mxu0 0
  %1766 = vmatpush2.bf16.msra.mxu0 0
  %1767 = vmatprep.subr.bf16.mxu0 0
  %1768 = vmatpush2.bf16.msra.mxu0 0
  %1769 = vmatprep.subr.bf16.mxu0 0
  %1770 = vmatpush2.bf16.msra.mxu0 0
  %1771 = vmatprep.subr.bf16.mxu0 0
  %1772 = vmatpush2.bf16.msra.mxu0 0
  %1773 = vmatprep.subr.bf16.mxu0 0
  %1774 = vmatpush2.bf16.msra.mxu0 0
  %1775 = vmatprep.subr.bf16.mxu0 0
  %1776 = vmatpush2.bf16.msra.mxu0 0
  %1777 = vmatprep.subr.bf16.mxu0 0
  %1778 = vmatpush2.bf16.msra.mxu0 0
  %1779 = vmatprep.subr.bf16.mxu0 0
  %1780 = vmatpush2.bf16.msra.mxu0 0
  %1781 = vmatprep.mubr.bf16.mxu0 0
  %1782 = vmatmul.mubr.bf16.gmra.mxu0 %v1748
  %v1783 = vpop.f32.mrf.mxu0
  %v1784 = vadd.f32 0.0, %v1783
  %v1785 = vpop.f32.mrf.mxu0
  %v1786 = vadd.f32 0.0, %v1785
  %v1787 = vpop.f32.mrf.mxu0
  %v1788 = vpop.f32.mrf.mxu0
  %1789 = vdwg.mxu0
  %1790 = vmatprep.subr.bf16.mxu0 %v290
  %1791 = vmatpush1.bf16.msra.mxu0 %v289
  %1792 = vmatprep.subr.bf16.mxu0 %v285
  %1793 = vmatpush1.bf16.msra.mxu0 %v284
  %1794 = vmatprep.subr.bf16.mxu0 %v280
  %1795 = vmatpush1.bf16.msra.mxu0 %v279
  %1796 = vmatprep.subr.bf16.mxu0 %v275
  %1797 = vmatpush1.bf16.msra.mxu0 %v274
  %1798 = vmatprep.subr.bf16.mxu0 %v270
  %1799 = vmatpush1.bf16.msra.mxu0 %v269
  %1800 = vmatprep.subr.bf16.mxu0 %v265
  %1801 = vmatpush1.bf16.msra.mxu0 %v264
  %1802 = vmatprep.subr.bf16.mxu0 %v260
  %1803 = vmatpush1.bf16.msra.mxu0 %v259
  %1804 = vmatprep.subr.bf16.mxu0 %v255
  %1805 = vmatpush1.bf16.msra.mxu0 %v254
  %1806 = vmatprep.subr.bf16.mxu0 0
  %1807 = vmatpush2.bf16.msra.mxu0 0
  %1808 = vmatprep.subr.bf16.mxu0 0
  %1809 = vmatpush2.bf16.msra.mxu0 0
  %1810 = vmatprep.subr.bf16.mxu0 0
  %1811 = vmatpush2.bf16.msra.mxu0 0
  %1812 = vmatprep.subr.bf16.mxu0 0
  %1813 = vmatpush2.bf16.msra.mxu0 0
  %1814 = vmatprep.subr.bf16.mxu0 0
  %1815 = vmatpush2.bf16.msra.mxu0 0
  %1816 = vmatprep.subr.bf16.mxu0 0
  %1817 = vmatpush2.bf16.msra.mxu0 0
  %1818 = vmatprep.subr.bf16.mxu0 0
  %1819 = vmatpush2.bf16.msra.mxu0 0
  %1820 = vmatprep.subr.bf16.mxu0 0
  %1821 = vmatpush2.bf16.msra.mxu0 0
  %1822 = vmatprep.mubr.bf16.mxu0 0
  %1823 = vmatmul.mubr.bf16.gmra.mxu0 %v1748
  %v1824 = vpop.f32.mrf.mxu0
  %v1825 = vadd.f32 0.0, %v1824
  %v1826 = vpop.f32.mrf.mxu0
  %v1827 = vadd.f32 0.0, %v1826
  %v1828 = vpop.f32.mrf.mxu0
  %v1829 = vpop.f32.mrf.mxu0
  %1830 = vdwg.mxu0
  %1831 = vmatprep.subr.bf16.mxu0 0
  %1832 = vmatpush1.bf16.msra.mxu0 %v291
  %1833 = vmatprep.subr.bf16.mxu0 0
  %1834 = vmatpush1.bf16.msra.mxu0 %v286
  %1835 = vmatprep.subr.bf16.mxu0 0
  %1836 = vmatpush1.bf16.msra.mxu0 %v281
  %1837 = vmatprep.subr.bf16.mxu0 0
  %1838 = vmatpush1.bf16.msra.mxu0 %v276
  %1839 = vmatprep.subr.bf16.mxu0 0
  %1840 = vmatpush1.bf16.msra.mxu0 %v271
  %1841 = vmatprep.subr.bf16.mxu0 0
  %1842 = vmatpush1.bf16.msra.mxu0 %v266
  %1843 = vmatprep.subr.bf16.mxu0 0
  %1844 = vmatpush1.bf16.msra.mxu0 %v261
  %1845 = vmatprep.subr.bf16.mxu0 0
  %1846 = vmatpush1.bf16.msra.mxu0 %v256
  %1847 = vmatprep.subr.bf16.mxu0 0
  %1848 = vmatpush2.bf16.msra.mxu0 0
  %1849 = vmatprep.subr.bf16.mxu0 0
  %1850 = vmatpush2.bf16.msra.mxu0 0
  %1851 = vmatprep.subr.bf16.mxu0 0
  %1852 = vmatpush2.bf16.msra.mxu0 0
  %1853 = vmatprep.subr.bf16.mxu0 0
  %1854 = vmatpush2.bf16.msra.mxu0 0
  %1855 = vmatprep.subr.bf16.mxu0 0
  %1856 = vmatpush2.bf16.msra.mxu0 0
  %1857 = vmatprep.subr.bf16.mxu0 0
  %1858 = vmatpush2.bf16.msra.mxu0 0
  %1859 = vmatprep.subr.bf16.mxu0 0
  %1860 = vmatpush2.bf16.msra.mxu0 0
  %1861 = vmatprep.subr.bf16.mxu0 0
  %1862 = vmatpush2.bf16.msra.mxu0 0
  %1863 = vmatprep.mubr.bf16.mxu0 0
  %1864 = vmatmul.mubr.bf16.gmra.mxu0 %v1748
  %v1865 = vpop.f32.mrf.mxu0
  %v1866 = vadd.f32 0.0, %v1865
  %v1867 = vpop.f32.mrf.mxu0
  %v1868 = vpop.f32.mrf.mxu0
  %v1869 = vpop.f32.mrf.mxu0
  %1870 = vdwg.mxu0
  %v1873 = vunpack.c.l.s4 1966171168
  %v1874 = vunpack.c.0.s8 %v1873
  %v1875 = vlaneseq
  %v1876 = vshrl.u32 %v1875, 7
  %v1877 = vsub.s32 %v1874, %v1876
  %v1878 = vrot.slane %v1784, %v1877
  %v1879 = vcombine.high %v1878, %v1878
  %v1881 = vunpack.c.l.s4 1966171168
  %v1882 = vunpack.c.0.s8 %v1881
  %v1883 = vlaneseq
  %v1884 = vshrl.u32 %v1883, 7
  %v1885 = vsub.s32 %v1882, %v1884
  %v1886 = vrot.slane %v1878, %v1885
  %v1888 = vunpack.c.l.s4 1966171168
  %v1889 = vunpack.c.0.s8 %v1888
  %v1890 = vlaneseq
  %v1891 = vshrl.u32 %v1890, 7
  %v1892 = vsub.s32 %v1889, %v1891
  %v1893 = vrot.slane %v1879, %v1892
  %v1894 = vlaneseq
  %v1895 = vshrl.u32 %v1894, 7
  %v1896 = vsub.s32 0, %v1895
  %v1897 = vrot.slane %v1886, %v1896
  %v1898 = vlaneseq
  %v1899 = vshrl.u32 %v1898, 7
  %v1900 = vsub.s32 0, %v1899
  %v1901 = vrot.slane %v1893, %v1900
  %v1904 = vadd.f32 %v32, %v1897
  %v1905 = vadd.f32 %v33, %v1901
  %v1906 = vtanh.pop %v1904
  %v1907 = vtanh.pop %v1905
  %v1908 = vmul.f32 %v1906, %v119
  %v1909 = vmul.f32 %v1907, %v119
  %1910 = vadd.xlane.f32.xlu0 %v1908
  %v1911 = vpop.xlane.xlu0 %1910
  %1912 = vadd.xlane.f32.xlu0 %v1909
  %v1913 = vpop.xlane.xlu0 %1912
  %v1916 = vlaneseq
  %v1917 = vshrl.u32 %v1916, 7
  %v1918 = vsub.s32 %v500, %v1917
  %v1919 = vrot.slane %v1911, %v1918
  %v1920 = vlaneseq
  %v1921 = vshrl.u32 %v1920, 7
  %v1922 = vsub.s32 %v500, %v1921
  %v1923 = vrot.slane %v1913, %v1922
  %v1924 = vsel %vm509, %v1923, %v1919
  %v1926 = vsel %vm512, %v1924, -inf
  %1927 = vmax.xlane.f32.xlu0 %v1926
  %v1928 = vpop.xlane.xlu0 %1927
  %v1930 = vlaneseq
  %v1931 = vshrl.u32 %v1930, 7
  %v1932 = vsub.s32 0, %v1931
  %v1933 = vrot.slane %v1928, %v1932
  %v1934 = vlaneseq
  %v1935 = vshrl.u32 %v1934, 7
  %v1936 = vsub.s32 1, %v1935
  %v1937 = vrot.slane %v1928, %v1936
  %v1940 = vsub.f32 %v1911, %v1933
  %v1941 = vsub.f32 %v1913, %v1937
  %v1942 = vmul.f32 %v1940, 1.442695
  %v1943 = vpow.pop %v1942
  %v1944 = vmul.f32 %v1941, 1.442695
  %v1945 = vpow.pop %v1944
  %1948 = vset.pattern.permute.xlu0 0
  %1949 = vperm.xlu0 %1948, %v1943
  %v1950 = vpop.permute.xlu0 %1949
  %1951 = vset.pattern.permute.xlu0 0
  %1952 = vperm.xlu0 %1951, %v1945
  %v1953 = vpop.permute.xlu0 %1952
  %v1954 = vlaneseq
  %v1955 = vshrl.u32 %v1954, 7
  %v1956 = vsub.s32 %v500, %v1955
  %v1957 = vrot.slane %v1950, %v1956
  %v1958 = vlaneseq
  %v1959 = vshrl.u32 %v1958, 7
  %v1960 = vsub.s32 %v500, %v1959
  %v1961 = vrot.slane %v1953, %v1960
  %v1962 = vsel %vm509, %v1961, %v1957
  %v1964 = vsel %vm512, %v1962, 0.0
  %1965 = vadd.xlane.f32.xlu0 %v1964
  %v1966 = vpop.xlane.xlu0 %1965
  %v1968 = vlaneseq
  %v1969 = vshrl.u32 %v1968, 7
  %v1970 = vsub.s32 0, %v1969
  %v1971 = vrot.slane %v1966, %v1970
  %v1972 = vlaneseq
  %v1973 = vshrl.u32 %v1972, 7
  %v1974 = vsub.s32 1, %v1973
  %v1975 = vrot.slane %v1966, %v1974
  %v1978 = vrcp.pop %v1971
  %v1979 = vmul.f32 %v1943, %v1978
  %v1980 = vrcp.pop %v1975
  %v1981 = vmul.f32 %v1945, %v1980
  %1983 = vset.pattern.permute.xlu0 0
  %1984 = vperm.xlu0 %1983, %v1979
  %v1985 = vpop.permute.xlu0 %1984
  %1988 = vset.pattern.permute.xlu0 0
  %1989 = vperm.xlu0 %1988, %v1981
  %v1990 = vpop.permute.xlu0 %1989
  %v1992 = vmul.f32 %v30, %v1985
  %v1993 = vmul.f32 %v31, %v1990
  %v1994 = vrot.slane %v1992, 4
  %v1995 = vadd.f32 %v1992, %v1994
  %v1996 = vrot.slane %v1995, 2
  %v1997 = vadd.f32 %v1995, %v1996
  %v1998 = vrot.slane %v1997, 1
  %v1999 = vadd.f32 %v1997, %v1998
  %v2000 = vrot.slane %v1993, 4
  %v2001 = vadd.f32 %v1993, %v2000
  %v2002 = vrot.slane %v2001, 2
  %v2003 = vadd.f32 %v2001, %v2002
  %v2004 = vrot.slane %v2003, 1
  %v2005 = vadd.f32 %v2003, %v2004
  %s2006 = scalar_lea.vmem %s4, 24
  %v2007 = vld [vmem:[%s2006] sm:$0xff]
  %v2012 = vcombine.low %v1786, %v1825
  %v2013 = vcombine.low %v1827, %v1866
  %v2015 = vunpack.c.l.s4 1983009808
  %v2016 = vunpack.c.0.s8 %v2015
  %v2017 = vlaneseq
  %v2018 = vshrl.u32 %v2017, 7
  %v2019 = vsub.s32 %v2016, %v2018
  %v2020 = vrot.slane %v2012, %v2019
  %v2022 = vunpack.c.l.s4 1983009808
  %v2023 = vunpack.c.0.s8 %v2022
  %v2024 = vlaneseq
  %v2025 = vshrl.u32 %v2024, 7
  %v2026 = vsub.s32 %v2023, %v2025
  %v2027 = vrot.slane %v2013, %v2026
  %v2028 = vcombine.low %v2020, %v2027
  %v2030 = vadd.f32 %v2007, %v2028
  %v2031 = vpack.c.bf16 %v1999, %v1999
  %v2032 = vpack.c.bf16 %v2005, %v2005
  %v2035 = vunpack.c.l.b16 %v2031
  %v2036 = vunpack.c.l.b16 %v2032
  %v2037 = vsel %vm509, %v2036, %v2035
  %v2038 = vpack.c.b16 %v2037, %v2037
  %2040 = vmatprep.subr.bf16.mxu0 %v751
  %2041 = vmatpush1.bf16.msra.mxu0 %v750
  %2042 = vmatprep.subr.bf16.mxu0 %v747
  %2043 = vmatpush1.bf16.msra.mxu0 %v746
  %2044 = vmatprep.subr.bf16.mxu0 %v743
  %2045 = vmatpush1.bf16.msra.mxu0 %v742
  %2046 = vmatprep.subr.bf16.mxu0 %v739
  %2047 = vmatpush1.bf16.msra.mxu0 %v738
  %2048 = vmatprep.subr.bf16.mxu0 %v735
  %2049 = vmatpush1.bf16.msra.mxu0 %v734
  %2050 = vmatprep.subr.bf16.mxu0 %v731
  %2051 = vmatpush1.bf16.msra.mxu0 %v730
  %2052 = vmatprep.subr.bf16.mxu0 %v727
  %2053 = vmatpush1.bf16.msra.mxu0 %v726
  %2054 = vmatprep.subr.bf16.mxu0 %v723
  %2055 = vmatpush1.bf16.msra.mxu0 %v722
  %2056 = vmatprep.subr.bf16.mxu0 0
  %2057 = vmatpush2.bf16.msra.mxu0 0
  %2058 = vmatprep.subr.bf16.mxu0 0
  %2059 = vmatpush2.bf16.msra.mxu0 0
  %2060 = vmatprep.subr.bf16.mxu0 0
  %2061 = vmatpush2.bf16.msra.mxu0 0
  %2062 = vmatprep.subr.bf16.mxu0 0
  %2063 = vmatpush2.bf16.msra.mxu0 0
  %2064 = vmatprep.subr.bf16.mxu0 0
  %2065 = vmatpush2.bf16.msra.mxu0 0
  %2066 = vmatprep.subr.bf16.mxu0 0
  %2067 = vmatpush2.bf16.msra.mxu0 0
  %2068 = vmatprep.subr.bf16.mxu0 0
  %2069 = vmatpush2.bf16.msra.mxu0 0
  %2070 = vmatprep.subr.bf16.mxu0 0
  %2071 = vmatpush2.bf16.msra.mxu0 0
  %2072 = vmatprep.mubr.bf16.mxu0 0
  %2073 = vmatmul.mubr.bf16.gmra.mxu0 %v2038
  %v2074 = vpop.f32.mrf.mxu0
  %v2075 = vadd.f32 0.0, %v2074
  %v2076 = vpop.f32.mrf.mxu0
  %v2077 = vadd.f32 0.0, %v2076
  %v2078 = vpop.f32.mrf.mxu0
  %v2079 = vpop.f32.mrf.mxu0
  %2080 = vdwg.mxu0
  %2081 = vmatprep.subr.bf16.mxu0 %v753
  %2082 = vmatpush1.bf16.msra.mxu0 %v752
  %2083 = vmatprep.subr.bf16.mxu0 %v749
  %2084 = vmatpush1.bf16.msra.mxu0 %v748
  %2085 = vmatprep.subr.bf16.mxu0 %v745
  %2086 = vmatpush1.bf16.msra.mxu0 %v744
  %2087 = vmatprep.subr.bf16.mxu0 %v741
  %2088 = vmatpush1.bf16.msra.mxu0 %v740
  %2089 = vmatprep.subr.bf16.mxu0 %v737
  %2090 = vmatpush1.bf16.msra.mxu0 %v736
  %2091 = vmatprep.subr.bf16.mxu0 %v733
  %2092 = vmatpush1.bf16.msra.mxu0 %v732
  %2093 = vmatprep.subr.bf16.mxu0 %v729
  %2094 = vmatpush1.bf16.msra.mxu0 %v728
  %2095 = vmatprep.subr.bf16.mxu0 %v725
  %2096 = vmatpush1.bf16.msra.mxu0 %v724
  %2097 = vmatprep.subr.bf16.mxu0 0
  %2098 = vmatpush2.bf16.msra.mxu0 0
  %2099 = vmatprep.subr.bf16.mxu0 0
  %2100 = vmatpush2.bf16.msra.mxu0 0
  %2101 = vmatprep.subr.bf16.mxu0 0
  %2102 = vmatpush2.bf16.msra.mxu0 0
  %2103 = vmatprep.subr.bf16.mxu0 0
  %2104 = vmatpush2.bf16.msra.mxu0 0
  %2105 = vmatprep.subr.bf16.mxu0 0
  %2106 = vmatpush2.bf16.msra.mxu0 0
  %2107 = vmatprep.subr.bf16.mxu0 0
  %2108 = vmatpush2.bf16.msra.mxu0 0
  %2109 = vmatprep.subr.bf16.mxu0 0
  %2110 = vmatpush2.bf16.msra.mxu0 0
  %2111 = vmatprep.subr.bf16.mxu0 0
  %2112 = vmatpush2.bf16.msra.mxu0 0
  %2113 = vmatprep.mubr.bf16.mxu0 0
  %2114 = vmatmul.mubr.bf16.gmra.mxu0 %v2038
  %v2115 = vpop.f32.mrf.mxu0
  %v2116 = vadd.f32 0.0, %v2115
  %v2117 = vpop.f32.mrf.mxu0
  %v2118 = vadd.f32 0.0, %v2117
  %v2119 = vpop.f32.mrf.mxu0
  %v2120 = vpop.f32.mrf.mxu0
  %2121 = vdwg.mxu0
  %v2126 = vcombine.low %v2075, %v2077
  %v2127 = vcombine.low %v2116, %v2118
  %v2129 = vunpack.c.l.s4 1983009808
  %v2130 = vunpack.c.0.s8 %v2129
  %v2131 = vlaneseq
  %v2132 = vshrl.u32 %v2131, 7
  %v2133 = vsub.s32 %v2130, %v2132
  %v2134 = vrot.slane %v2126, %v2133
  %v2136 = vunpack.c.l.s4 1983009808
  %v2137 = vunpack.c.0.s8 %v2136
  %v2138 = vlaneseq
  %v2139 = vshrl.u32 %v2138, 7
  %v2140 = vsub.s32 %v2137, %v2139
  %v2141 = vrot.slane %v2127, %v2140
  %v2142 = vcombine.low %v2134, %v2141
  %v2144 = vadd.f32 %v2030, %v2142
  %v2145 = vxor.u32 %v2144, 2147483648
  %v2146 = vmul.f32 %v2145, 1.442695
  %v2147 = vpow.pop %v2146
  %v2148 = vadd.f32 %v2147, 1.0
  %v2149 = vrcp.pop %v2148
  %v2150 = vmul.f32 1.0, %v2149
  %v2152 = vrot.slane %v2144, 6
  %v2154 = vtanh.pop %v2152
  %v2156 = vrot.slane %v2150, 2
  %v2158 = vmul.f32 %v2156, %v1742
  %v2159 = vmul.f32 %v2150, %v2154
  %v2160 = vadd.f32 %v2158, %v2159
  %v2161 = vtanh.pop %v2160
  %v2162 = vrot.slane %v2150, 4
  %v2164 = vmul.f32 %v2162, %v2161
  %2165 = vst [vmem:[#allocation4 + $0x6] sm:$0x3] %v2164
  %2166 = vst [vmem:[#allocation2] sm:$0x3] %v2164
  %2167 = vst [vmem:[#allocation3] sm:$0x3] %v2160
  %v2168 = vld [vmem:[#allocation4] sm:$0xff]
  %v2169 = vpack.c.bf16 %v2168, %v2168
  %2170 = vst [vmem:[%s6] sm:$0xf] %v2169
  // Predicated region
  $region30: #{decoder_forward.2} parent=0 // pred_check
    _
  $region31: #{decoder_forward.2} parent=0 // pred_check_branch
    %2172 = sbr.rel (0) target = $region33
  $region32: #{decoder_forward.2} parent=0 // pred_region
    _
  $region33: #{decoder_forward.2} parent=0 // pred_fallthru
    _
  // Predicated region
  $region34: #{decoder_forward.2} parent=0 // pred_check
    _
  $region35: #{decoder_forward.2} parent=0 // pred_check_branch
    %2174 = sbr.rel (0) target = $region37
  $region36: #{decoder_forward.2} parent=0 // pred_region
    _
  $region37: #{decoder_forward.2} parent=0 // pred_fallthru
    _

</llo_original>
